<compile_context>
chip_gen: v5e
topology: v5e:2x2
jax: 0.10.0
libtpu: 0.0.40
codegen_flags: <defaults>
</compile_context>

<pallas_src>
import functools

import jax
import jax.numpy as jnp
import numpy as np
from jax import lax
from jax.experimental import pallas as pl
from jax.experimental.pallas import tpu as pltpu


# -----------------------------------------------------------------------------
# Fused kernel: all LSTM layers + ReLU + fc1 in one pallas_call.
# Gate order matches PyTorch: i, f, g, o.
# -----------------------------------------------------------------------------
def _fused_decoder_kernel(num_layers, hidden_size, *refs):
    L, H = num_layers, hidden_size
    (x_ref, h0_ref, c0_ref, w_ref, b_ref, wfc_ref, bfc_ref,
     out_ref, hn_ref, cn_ref, act_ref) = refs

    T, B, Dmax = x_ref.shape                  # x is time-major, lane-padded
    mm_dtype = w_ref.dtype                    # matmul operand dtype (bf16/f32)

    # ---- Prologue (everything here is off the serial recurrence) -----------
    # Hoisted loop-invariant weight/bias loads.  The packed slab per layer is
    # [W_ih^T zero-padded to Dmax rows ; W_hh^T].
    w_in, w_rec, bias = [], [], []
    for l in range(L):
        w_full = w_ref[l]                                     # (Dmax+H, 4H)
        w_in.append(w_full[:(Dmax if l == 0 else H), :])      # input proj part
        w_rec.append(w_full[Dmax:, :])                        # (H, 4H)
        bias.append(b_ref[l])                                 # (1, 4H)

    # Layer-0 input projection hoisted over ALL timesteps: one MXU matmul for
    # the whole sequence; xproj0[t] below is a dense leading-dim slice.
    x_flat = x_ref[...].reshape(T * B, Dmax)                  # free leading merge
    xproj0 = (jnp.dot(x_flat.astype(mm_dtype), w_in[0],
                      preferred_element_type=jnp.float32)
              + bias[0]).reshape(T, B, 4 * H)

    h = [h0_ref[l].astype(jnp.float32) for l in range(L)]     # (B, H) each
    c = [c0_ref[l].astype(jnp.float32) for l in range(L)]

    # ---- Wavefronted recurrence (fully unrolled; T, L static & small) ------
    # States are pure SSA values (no inter-layer scratch round trip), so cell
    # (l, t) depends only on (l, t-1) and (l-1, t): the dependency DAG is the
    # layer/time wavefront and independent cells overlap.  Critical path is
    # T + L - 1 cells instead of T * L, one matmul + one EUP chain per cell.
    for t in range(T):
        pre = xproj0[t]                        # (B, 4H), off the serial chain
        for l in range(L):
            # Only h @ W_hh sits on this cell's serial chain.
            gates = pre + jnp.dot(h[l].astype(mm_dtype), w_rec[l],
                                  preferred_element_type=jnp.float32)
            # Sigmoid as a single tanh EUP op (exact identity), applied to the
            # whole (B, 4H) gate vector; gate split = static lane slices.
            sig = 0.5 * (jnp.tanh(0.5 * gates) + 1.0)
            th = jnp.tanh(gates)
            i_g = sig[:, 0 * H:1 * H]
            f_g = sig[:, 1 * H:2 * H]
            g_g = th[:, 2 * H:3 * H]
            o_g = sig[:, 3 * H:4 * H]
            c[l] = f_g * c[l] + i_g * g_g
            h[l] = o_g * jnp.tanh(c[l])
            if l + 1 < L:
                # Wavefront hand-off: layer (l+1)'s input projection at time t
                # depends only on h[l] (ready one diagonal earlier than cell
                # (l+1, t)'s recurrent input), so it is off that serial chain.
                pre = (jnp.dot(h[l].astype(mm_dtype), w_in[l + 1],
                               preferred_element_type=jnp.float32)
                       + bias[l + 1])
        # Time-major scratch: dense leading-dim store, off the serial chain.
        act_ref[t] = h[L - 1]

    # ---- Epilogue: final states + fused ReLU + fc1 --------------------------
    for l in range(L):
        hn_ref[l] = h[l].astype(hn_ref.dtype)
        cn_ref[l] = c[l].astype(cn_ref.dtype)

    y = jnp.maximum(act_ref[...].reshape(T * B, H), 0.0)
    out = (jnp.dot(y.astype(mm_dtype), wfc_ref[...],
                   preferred_element_type=jnp.float32) + bfc_ref[...])
    out_ref[...] = out.reshape(T, B, out_ref.shape[-1]).astype(out_ref.dtype)


# -----------------------------------------------------------------------------
# Wrapper: one pallas_call for the whole forward pass.
# -----------------------------------------------------------------------------
def lstm_decoder_forward(packed, x, state):
    """x: (B, T, input_size) batch_first; state = (h0, c0), each (L, B, H)."""
    h0, c0 = state
    L = packed["num_layers"]
    H = packed["hidden_size"]
    Dmax = packed["d_max"]
    B, T, D = x.shape
    O = packed["fc_w_t"].shape[1]

    # Time-major, lane-padded layer-0 input: the kernel's per-step access is
    # then a dense leading-dim slice (padding columns hit zero weight rows).
    xt = jnp.transpose(x.astype(jnp.float32), (1, 0, 2))          # (T, B, D)
    if Dmax > D:
        xt = jnp.concatenate(
            [xt, jnp.zeros((T, B, Dmax - D), jnp.float32)], axis=-1)

    vmem = pl.BlockSpec(memory_space=pltpu.MemorySpace.VMEM)
    out_tm, h_n, c_n = pl.pallas_call(
        functools.partial(_fused_decoder_kernel, L, H),
        out_shape=(
            jax.ShapeDtypeStruct((T, B, O), jnp.float32),   # time-major fc out
            jax.ShapeDtypeStruct((L, B, H), jnp.float32),
            jax.ShapeDtypeStruct((L, B, H), jnp.float32),
        ),
        in_specs=[vmem] * 7,
        out_specs=(vmem, vmem, vmem),
        scratch_shapes=[pltpu.VMEM((T, B, H), jnp.float32)],
    )(xt, h0.astype(jnp.float32), c0.astype(jnp.float32),
      packed["w_slab"], packed["b_slab"], packed["fc_w_t"], packed["fc_b"])

    # Restore batch-first ordering (tiny wrapper transpose of (T, B, O)).
    return jnp.transpose(out_tm, (1, 0, 2)), (h_n, c_n)


# -----------------------------------------------------------------------------
# Parameters: PyTorch-layout init + one-time packing for the kernel.
# -----------------------------------------------------------------------------
def init_raw_params(key, input_size, output_size, hidden_size, num_layers):
    """PyTorch-shaped params (nn.LSTM / nn.Linear default uniform init)."""
    bound = 1.0 / float(np.sqrt(hidden_size))
    raw = {"lstm": []}
    for l in range(num_layers):
        d_in = input_size if l == 0 else hidden_size
        key, k1, k2, k3, k4 = jax.random.split(key, 5)
        raw["lstm"].append({
            "w_ih": jax.random.uniform(k1, (4 * hidden_size, d_in),
                                       jnp.float32, -bound, bound),
            "w_hh": jax.random.uniform(k2, (4 * hidden_size, hidden_size),
                                       jnp.float32, -bound, bound),
            "b_ih": jax.random.uniform(k3, (4 * hidden_size,),
                                       jnp.float32, -bound, bound),
            "b_hh": jax.random.uniform(k4, (4 * hidden_size,),
                                       jnp.float32, -bound, bound),
        })
    key, k5, k6 = jax.random.split(key, 3)
    raw["fc_w"] = jax.random.uniform(k5, (output_size, hidden_size),
                                     jnp.float32, -bound, bound)
    raw["fc_b"] = jax.random.uniform(k6, (output_size,),
                                     jnp.float32, -bound, bound)
    return raw


def pack_params(raw, matmul_dtype=jnp.bfloat16):
    """One-time packing into a few stacked slabs:
      * w_slab (L, Dmax+H, 4H): per layer [W_ih^T zero-padded to Dmax ; W_hh^T]
      * b_slab (L, 1, 4H):      combined b_ih + b_hh (kept f32)
      * fc_w_t (H, O), fc_b (1, O)
    Default matmul operand dtype is bf16 (f32 accumulation stays in-kernel);
    pass matmul_dtype=jnp.float32 for exact PyTorch-f32 parity."""
    lstm = raw["lstm"]
    L = len(lstm)
    H = lstm[0]["w_hh"].shape[1]
    D0 = lstm[0]["w_ih"].shape[1]
    Dmax = max(D0, H)
    P = Dmax + H

    w_slab = np.zeros((L, P, 4 * H), np.float32)
    b_slab = np.zeros((L, 1, 4 * H), np.float32)
    for l, p in enumerate(lstm):
        d_in = p["w_ih"].shape[1]
        w_slab[l, :d_in, :] = np.asarray(p["w_ih"]).T
        w_slab[l, Dmax:, :] = np.asarray(p["w_hh"]).T
        b_slab[l, 0, :] = np.asarray(p["b_ih"]) + np.asarray(p["b_hh"])

    return {
        "num_layers": L,
        "hidden_size": H,
        "d_max": Dmax,
        "w_slab": jnp.asarray(w_slab).astype(matmul_dtype),
        "b_slab": jnp.asarray(b_slab),                               # f32
        "fc_w_t": jnp.asarray(np.asarray(raw["fc_w"]).T).astype(matmul_dtype),
        "fc_b": jnp.asarray(np.asarray(raw["fc_b"]).reshape(1, -1)), # f32
    }


# -----------------------------------------------------------------------------
# Pure-JAX reference (PyTorch semantics) for a correctness check.
# -----------------------------------------------------------------------------
def reference_forward(raw, x, state):
    h0, c0 = state
    hp = lax.Precision.HIGHEST
    seq = x
    h_n, c_n = [], []
    for l, p in enumerate(raw["lstm"]):
        H = p["w_hh"].shape[1]
        b = p["b_ih"] + p["b_hh"]
        h, c = h0[l], c0[l]
        outs = []
        for t in range(seq.shape[1]):
            g = (jnp.dot(seq[:, t, :], p["w_ih"].T, precision=hp)
                 + jnp.dot(h, p["w_hh"].T, precision=hp) + b)
            i = jax.nn.sigmoid(g[:, 0 * H:1 * H])
            f = jax.nn.sigmoid(g[:, 1 * H:2 * H])
            gg = jnp.tanh(g[:, 2 * H:3 * H])
            o = jax.nn.sigmoid(g[:, 3 * H:4 * H])
            c = f * c + i * gg
            h = o * jnp.tanh(c)
            outs.append(h)
        seq = jnp.stack(outs, axis=1)
        h_n.append(h)
        c_n.append(c)
    y = jnp.maximum(seq, 0.0)
    out = jnp.dot(y, raw["fc_w"].T, precision=hp) + raw["fc_b"]
    return out, (jnp.stack(h_n, 0), jnp.stack(c_n, 0))


if __name__ == "__main__":
    # Small shapes consistent with the module's forward.
    input_size = 16
    output_size = 8
    hidden_size = 32
    num_layers = 2
    kernel_size = 3    # conv1 is unused in forward
    embed_size = 16    # conv1 is unused in forward
    batch = 2
    seq = 8

    key = jax.random.PRNGKey(0)
    key, kx, kh, kc = jax.random.split(key, 4)
    raw = init_raw_params(key, input_size, output_size, hidden_size, num_layers)

    x = jax.random.normal(kx, (batch, seq, input_size), dtype=jnp.float32)
    h0 = jax.random.normal(kh, (num_layers, batch, hidden_size), dtype=jnp.float32)
    c0 = jax.random.normal(kc, (num_layers, batch, hidden_size), dtype=jnp.float32)

    ref_out, (ref_h, ref_c) = reference_forward(raw, x, (h0, c0))

    # ---- f32 parity mode: exact PyTorch-f32 semantics, strict tolerance -----
    packed_f32 = pack_params(raw, matmul_dtype=jnp.float32)
    fwd_f32 = jax.jit(lambda xx, hh, cc: lstm_decoder_forward(packed_f32, xx, (hh, cc)))
    out_pm25, (h_n, c_n) = fwd_f32(x, h0, c0)
    jax.block_until_ready((out_pm25, h_n, c_n))

    assert out_pm25.shape == (batch, seq, output_size)
    assert h_n.shape == (num_layers, batch, hidden_size)
    assert c_n.shape == (num_layers, batch, hidden_size)
    np.testing.assert_allclose(np.asarray(out_pm25), np.asarray(ref_out),
                               rtol=1e-4, atol=1e-4)
    np.testing.assert_allclose(np.asarray(h_n), np.asarray(ref_h),
                               rtol=1e-4, atol=1e-4)
    np.testing.assert_allclose(np.asarray(c_n), np.asarray(ref_c),
                               rtol=1e-4, atol=1e-4)

    # ---- default bf16 fast path (v5e/v6e/v7x): lossy vs. the f32 reference,
    # so only a loose sanity bound is asserted (not a parity check). ---------
    packed_bf16 = pack_params(raw)   # matmul_dtype=bf16 by default
    fwd_bf16 = jax.jit(lambda xx, hh, cc: lstm_decoder_forward(packed_bf16, xx, (hh, cc)))
    out_bf16, (h_bf16, c_bf16) = fwd_bf16(x, h0, c0)
    jax.block_until_ready((out_bf16, h_bf16, c_bf16))

    assert out_bf16.shape == (batch, seq, output_size)
    assert h_bf16.shape == (num_layers, batch, hidden_size)
    assert c_bf16.shape == (num_layers, batch, hidden_size)
    assert bool(np.all(np.isfinite(np.asarray(out_bf16))))
    np.testing.assert_allclose(np.asarray(out_bf16), np.asarray(ref_out),
                               rtol=0.0, atol=0.5)
    np.testing.assert_allclose(np.asarray(h_bf16), np.asarray(ref_h),
                               rtol=0.0, atol=0.5)

    print("KERNEL_OK")
</pallas_src>

<mosaic_0001>
module attributes {stable_mosaic.version = 11 : i64} {
  func.func @_fused_decoder_kernel(%arg0: memref<8x2x32xf32, #tpu.memory_space<vmem>>, %arg1: memref<2x2x32xf32, #tpu.memory_space<vmem>>, %arg2: memref<2x2x32xf32, #tpu.memory_space<vmem>>, %arg3: memref<2x64x128xf32, #tpu.memory_space<vmem>>, %arg4: memref<2x1x128xf32, #tpu.memory_space<vmem>>, %arg5: memref<32x8xf32, #tpu.memory_space<vmem>>, %arg6: memref<1x8xf32, #tpu.memory_space<vmem>>, %arg7: memref<8x2x8xf32, #tpu.memory_space<vmem>>, %arg8: memref<2x2x32xf32, #tpu.memory_space<vmem>>, %arg9: memref<2x2x32xf32, #tpu.memory_space<vmem>>, %arg10: memref<8x2x32xf32, #tpu.memory_space<vmem>>) attributes {dimension_semantics = [], scalar_prefetch = 0 : i64, scratch_operands = 1 : i64, tpu.core_type = #tpu.core_type<tc>} {
    %c0 = arith.constant 0 : index
    %c0_0 = arith.constant 0 : index
    %c0_1 = arith.constant 0 : index
    %0 = vector.load %arg3[%c0, %c0_0, %c0_1] : memref<2x64x128xf32, #tpu.memory_space<vmem>>, vector<1x64x128xf32>
    %1 = vector.shape_cast %0 : vector<1x64x128xf32> to vector<64x128xf32>
    %2 = vector.extract_strided_slice %1 {offsets = [0, 0], sizes = [32, 128], strides = [1, 1]} : vector<64x128xf32> to vector<32x128xf32>
    %3 = vector.extract_strided_slice %1 {offsets = [32, 0], sizes = [32, 128], strides = [1, 1]} : vector<64x128xf32> to vector<32x128xf32>
    %c0_2 = arith.constant 0 : index
    %c0_3 = arith.constant 0 : index
    %c0_4 = arith.constant 0 : index
    %4 = vector.load %arg4[%c0_2, %c0_3, %c0_4] : memref<2x1x128xf32, #tpu.memory_space<vmem>>, vector<1x1x128xf32>
    %5 = vector.shape_cast %4 : vector<1x1x128xf32> to vector<1x128xf32>
    %c1 = arith.constant 1 : index
    %c0_5 = arith.constant 0 : index
    %c0_6 = arith.constant 0 : index
    %6 = vector.load %arg3[%c1, %c0_5, %c0_6] : memref<2x64x128xf32, #tpu.memory_space<vmem>>, vector<1x64x128xf32>
    %7 = vector.shape_cast %6 : vector<1x64x128xf32> to vector<64x128xf32>
    %8 = vector.extract_strided_slice %7 {offsets = [0, 0], sizes = [32, 128], strides = [1, 1]} : vector<64x128xf32> to vector<32x128xf32>
    %9 = vector.extract_strided_slice %7 {offsets = [32, 0], sizes = [32, 128], strides = [1, 1]} : vector<64x128xf32> to vector<32x128xf32>
    %c1_7 = arith.constant 1 : index
    %c0_8 = arith.constant 0 : index
    %c0_9 = arith.constant 0 : index
    %10 = vector.load %arg4[%c1_7, %c0_8, %c0_9] : memref<2x1x128xf32, #tpu.memory_space<vmem>>, vector<1x1x128xf32>
    %11 = vector.shape_cast %10 : vector<1x1x128xf32> to vector<1x128xf32>
    %c0_10 = arith.constant 0 : index
    %c0_11 = arith.constant 0 : index
    %c0_12 = arith.constant 0 : index
    %12 = vector.load %arg0[%c0_10, %c0_11, %c0_12] : memref<8x2x32xf32, #tpu.memory_space<vmem>>, vector<8x2x32xf32>
    %13 = vector.shape_cast %12 : vector<8x2x32xf32> to vector<16x32xf32>
    %cst = arith.constant dense<0.000000e+00> : vector<16x128xf32>
    %14 = tpu.matmul %13, %2, %cst {dimension_numbers = #tpu.dot_dimension_numbers<[1], [0], [0], [1], [0, 0, 1, 1], [], []>} : vector<16x32xf32>, vector<32x128xf32>, vector<16x128xf32> -> vector<16x128xf32>
    %15 = vector.broadcast %5 : vector<1x128xf32> to vector<16x128xf32>
    %16 = arith.addf %14, %15 : vector<16x128xf32>
    %17 = vector.shape_cast %16 : vector<16x128xf32> to vector<8x2x128xf32>
    %c0_13 = arith.constant 0 : index
    %c0_14 = arith.constant 0 : index
    %c0_15 = arith.constant 0 : index
    %18 = vector.load %arg1[%c0_13, %c0_14, %c0_15] : memref<2x2x32xf32, #tpu.memory_space<vmem>>, vector<1x2x32xf32>
    %19 = vector.shape_cast %18 : vector<1x2x32xf32> to vector<2x32xf32>
    %c1_16 = arith.constant 1 : index
    %c0_17 = arith.constant 0 : index
    %c0_18 = arith.constant 0 : index
    %20 = vector.load %arg1[%c1_16, %c0_17, %c0_18] : memref<2x2x32xf32, #tpu.memory_space<vmem>>, vector<1x2x32xf32>
    %21 = vector.shape_cast %20 : vector<1x2x32xf32> to vector<2x32xf32>
    %c0_19 = arith.constant 0 : index
    %c0_20 = arith.constant 0 : index
    %c0_21 = arith.constant 0 : index
    %22 = vector.load %arg2[%c0_19, %c0_20, %c0_21] : memref<2x2x32xf32, #tpu.memory_space<vmem>>, vector<1x2x32xf32>
    %23 = vector.shape_cast %22 : vector<1x2x32xf32> to vector<2x32xf32>
    %c1_22 = arith.constant 1 : index
    %c0_23 = arith.constant 0 : index
    %c0_24 = arith.constant 0 : index
    %24 = vector.load %arg2[%c1_22, %c0_23, %c0_24] : memref<2x2x32xf32, #tpu.memory_space<vmem>>, vector<1x2x32xf32>
    %25 = vector.shape_cast %24 : vector<1x2x32xf32> to vector<2x32xf32>
    %26 = vector.extract_strided_slice %17 {offsets = [0, 0, 0], sizes = [1, 2, 128], strides = [1, 1, 1]} : vector<8x2x128xf32> to vector<1x2x128xf32>
    %27 = vector.shape_cast %26 : vector<1x2x128xf32> to vector<2x128xf32>
    %cst_25 = arith.constant dense<0.000000e+00> : vector<2x128xf32>
    %28 = tpu.matmul %19, %3, %cst_25 {dimension_numbers = #tpu.dot_dimension_numbers<[1], [0], [0], [1], [0, 0, 1, 1], [], []>} : vector<2x32xf32>, vector<32x128xf32>, vector<2x128xf32> -> vector<2x128xf32>
    %29 = arith.addf %27, %28 : vector<2x128xf32>
    %cst_26 = arith.constant 5.000000e-01 : f32
    %30 = vector.broadcast %cst_26 : f32 to vector<2x128xf32>
    %31 = arith.mulf %30, %29 : vector<2x128xf32>
    %32 = math.tanh %31 : vector<2x128xf32>
    %cst_27 = arith.constant 1.000000e+00 : f32
    %33 = vector.broadcast %cst_27 : f32 to vector<2x128xf32>
    %34 = arith.addf %32, %33 : vector<2x128xf32>
    %cst_28 = arith.constant 5.000000e-01 : f32
    %35 = vector.broadcast %cst_28 : f32 to vector<2x128xf32>
    %36 = arith.mulf %35, %34 : vector<2x128xf32>
    %37 = math.tanh %29 : vector<2x128xf32>
    %38 = vector.extract_strided_slice %36 {offsets = [0, 0], sizes = [2, 32], strides = [1, 1]} : vector<2x128xf32> to vector<2x32xf32>
    %39 = vector.extract_strided_slice %36 {offsets = [0, 32], sizes = [2, 32], strides = [1, 1]} : vector<2x128xf32> to vector<2x32xf32>
    %40 = vector.extract_strided_slice %37 {offsets = [0, 64], sizes = [2, 32], strides = [1, 1]} : vector<2x128xf32> to vector<2x32xf32>
    %41 = vector.extract_strided_slice %36 {offsets = [0, 96], sizes = [2, 32], strides = [1, 1]} : vector<2x128xf32> to vector<2x32xf32>
    %42 = arith.mulf %39, %23 : vector<2x32xf32>
    %43 = arith.mulf %38, %40 : vector<2x32xf32>
    %44 = arith.addf %42, %43 : vector<2x32xf32>
    %45 = math.tanh %44 : vector<2x32xf32>
    %46 = arith.mulf %41, %45 : vector<2x32xf32>
    %cst_29 = arith.constant dense<0.000000e+00> : vector<2x128xf32>
    %47 = tpu.matmul %46, %8, %cst_29 {dimension_numbers = #tpu.dot_dimension_numbers<[1], [0], [0], [1], [0, 0, 1, 1], [], []>} : vector<2x32xf32>, vector<32x128xf32>, vector<2x128xf32> -> vector<2x128xf32>
    %48 = vector.broadcast %11 : vector<1x128xf32> to vector<2x128xf32>
    %49 = arith.addf %47, %48 : vector<2x128xf32>
    %cst_30 = arith.constant dense<0.000000e+00> : vector<2x128xf32>
    %50 = tpu.matmul %21, %9, %cst_30 {dimension_numbers = #tpu.dot_dimension_numbers<[1], [0], [0], [1], [0, 0, 1, 1], [], []>} : vector<2x32xf32>, vector<32x128xf32>, vector<2x128xf32> -> vector<2x128xf32>
    %51 = arith.addf %49, %50 : vector<2x128xf32>
    %cst_31 = arith.constant 5.000000e-01 : f32
    %52 = vector.broadcast %cst_31 : f32 to vector<2x128xf32>
    %53 = arith.mulf %52, %51 : vector<2x128xf32>
    %54 = math.tanh %53 : vector<2x128xf32>
    %cst_32 = arith.constant 1.000000e+00 : f32
    %55 = vector.broadcast %cst_32 : f32 to vector<2x128xf32>
    %56 = arith.addf %54, %55 : vector<2x128xf32>
    %cst_33 = arith.constant 5.000000e-01 : f32
    %57 = vector.broadcast %cst_33 : f32 to vector<2x128xf32>
    %58 = arith.mulf %57, %56 : vector<2x128xf32>
    %59 = math.tanh %51 : vector<2x128xf32>
    %60 = vector.extract_strided_slice %58 {offsets = [0, 0], sizes = [2, 32], strides = [1, 1]} : vector<2x128xf32> to vector<2x32xf32>
    %61 = vector.extract_strided_slice %58 {offsets = [0, 32], sizes = [2, 32], strides = [1, 1]} : vector<2x128xf32> to vector<2x32xf32>
    %62 = vector.extract_strided_slice %59 {offsets = [0, 64], sizes = [2, 32], strides = [1, 1]} : vector<2x128xf32> to vector<2x32xf32>
    %63 = vector.extract_strided_slice %58 {offsets = [0, 96], sizes = [2, 32], strides = [1, 1]} : vector<2x128xf32> to vector<2x32xf32>
    %64 = arith.mulf %61, %25 : vector<2x32xf32>
    %65 = arith.mulf %60, %62 : vector<2x32xf32>
    %66 = arith.addf %64, %65 : vector<2x32xf32>
    %67 = math.tanh %66 : vector<2x32xf32>
    %68 = arith.mulf %63, %67 : vector<2x32xf32>
    %c0_34 = arith.constant 0 : index
    %c0_35 = arith.constant 0 : index
    %c0_36 = arith.constant 0 : index
    %69 = vector.load %arg10[%c0_34, %c0_35, %c0_36] : memref<8x2x32xf32, #tpu.memory_space<vmem>>, vector<1x2x32xf32>
    %70 = vector.shape_cast %69 : vector<1x2x32xf32> to vector<2x32xf32>
    %71 = vector.shape_cast %68 : vector<2x32xf32> to vector<1x2x32xf32>
    tpu.vector_store %arg10[%c0_34, %c0_35, %c0_36], %71 {strides = array<i32>} : memref<8x2x32xf32, #tpu.memory_space<vmem>>, vector<1x2x32xf32>,
    %72 = vector.extract_strided_slice %17 {offsets = [1, 0, 0], sizes = [1, 2, 128], strides = [1, 1, 1]} : vector<8x2x128xf32> to vector<1x2x128xf32>
    %73 = vector.shape_cast %72 : vector<1x2x128xf32> to vector<2x128xf32>
    %cst_37 = arith.constant dense<0.000000e+00> : vector<2x128xf32>
    %74 = tpu.matmul %46, %3, %cst_37 {dimension_numbers = #tpu.dot_dimension_numbers<[1], [0], [0], [1], [0, 0, 1, 1], [], []>} : vector<2x32xf32>, vector<32x128xf32>, vector<2x128xf32> -> vector<2x128xf32>
    %75 = arith.addf %73, %74 : vector<2x128xf32>
    %cst_38 = arith.constant 5.000000e-01 : f32
    %76 = vector.broadcast %cst_38 : f32 to vector<2x128xf32>
    %77 = arith.mulf %76, %75 : vector<2x128xf32>
    %78 = math.tanh %77 : vector<2x128xf32>
    %cst_39 = arith.constant 1.000000e+00 : f32
    %79 = vector.broadcast %cst_39 : f32 to vector<2x128xf32>
    %80 = arith.addf %78, %79 : vector<2x128xf32>
    %cst_40 = arith.constant 5.000000e-01 : f32
    %81 = vector.broadcast %cst_40 : f32 to vector<2x128xf32>
    %82 = arith.mulf %81, %80 : vector<2x128xf32>
    %83 = math.tanh %75 : vector<2x128xf32>
    %84 = vector.extract_strided_slice %82 {offsets = [0, 0], sizes = [2, 32], strides = [1, 1]} : vector<2x128xf32> to vector<2x32xf32>
    %85 = vector.extract_strided_slice %82 {offsets = [0, 32], sizes = [2, 32], strides = [1, 1]} : vector<2x128xf32> to vector<2x32xf32>
    %86 = vector.extract_strided_slice %83 {offsets = [0, 64], sizes = [2, 32], strides = [1, 1]} : vector<2x128xf32> to vector<2x32xf32>
    %87 = vector.extract_strided_slice %82 {offsets = [0, 96], sizes = [2, 32], strides = [1, 1]} : vector<2x128xf32> to vector<2x32xf32>
    %88 = arith.mulf %85, %44 : vector<2x32xf32>
    %89 = arith.mulf %84, %86 : vector<2x32xf32>
    %90 = arith.addf %88, %89 : vector<2x32xf32>
    %91 = math.tanh %90 : vector<2x32xf32>
    %92 = arith.mulf %87, %91 : vector<2x32xf32>
    %cst_41 = arith.constant dense<0.000000e+00> : vector<2x128xf32>
    %93 = tpu.matmul %92, %8, %cst_41 {dimension_numbers = #tpu.dot_dimension_numbers<[1], [0], [0], [1], [0, 0, 1, 1], [], []>} : vector<2x32xf32>, vector<32x128xf32>, vector<2x128xf32> -> vector<2x128xf32>
    %94 = vector.broadcast %11 : vector<1x128xf32> to vector<2x128xf32>
    %95 = arith.addf %93, %94 : vector<2x128xf32>
    %cst_42 = arith.constant dense<0.000000e+00> : vector<2x128xf32>
    %96 = tpu.matmul %68, %9, %cst_42 {dimension_numbers = #tpu.dot_dimension_numbers<[1], [0], [0], [1], [0, 0, 1, 1], [], []>} : vector<2x32xf32>, vector<32x128xf32>, vector<2x128xf32> -> vector<2x128xf32>
    %97 = arith.addf %95, %96 : vector<2x128xf32>
    %cst_43 = arith.constant 5.000000e-01 : f32
    %98 = vector.broadcast %cst_43 : f32 to vector<2x128xf32>
    %99 = arith.mulf %98, %97 : vector<2x128xf32>
    %100 = math.tanh %99 : vector<2x128xf32>
    %cst_44 = arith.constant 1.000000e+00 : f32
    %101 = vector.broadcast %cst_44 : f32 to vector<2x128xf32>
    %102 = arith.addf %100, %101 : vector<2x128xf32>
    %cst_45 = arith.constant 5.000000e-01 : f32
    %103 = vector.broadcast %cst_45 : f32 to vector<2x128xf32>
    %104 = arith.mulf %103, %102 : vector<2x128xf32>
    %105 = math.tanh %97 : vector<2x128xf32>
    %106 = vector.extract_strided_slice %104 {offsets = [0, 0], sizes = [2, 32], strides = [1, 1]} : vector<2x128xf32> to vector<2x32xf32>
    %107 = vector.extract_strided_slice %104 {offsets = [0, 32], sizes = [2, 32], strides = [1, 1]} : vector<2x128xf32> to vector<2x32xf32>
    %108 = vector.extract_strided_slice %105 {offsets = [0, 64], sizes = [2, 32], strides = [1, 1]} : vector<2x128xf32> to vector<2x32xf32>
    %109 = vector.extract_strided_slice %104 {offsets = [0, 96], sizes = [2, 32], strides = [1, 1]} : vector<2x128xf32> to vector<2x32xf32>
    %110 = arith.mulf %107, %66 : vector<2x32xf32>
    %111 = arith.mulf %106, %108 : vector<2x32xf32>
    %112 = arith.addf %110, %111 : vector<2x32xf32>
    %113 = math.tanh %112 : vector<2x32xf32>
    %114 = arith.mulf %109, %113 : vector<2x32xf32>
    %c1_46 = arith.constant 1 : index
    %c0_47 = arith.constant 0 : index
    %c0_48 = arith.constant 0 : index
    %115 = vector.load %arg10[%c1_46, %c0_47, %c0_48] : memref<8x2x32xf32, #tpu.memory_space<vmem>>, vector<1x2x32xf32>
    %116 = vector.shape_cast %115 : vector<1x2x32xf32> to vector<2x32xf32>
    %117 = vector.shape_cast %114 : vector<2x32xf32> to vector<1x2x32xf32>
    tpu.vector_store %arg10[%c1_46, %c0_47, %c0_48], %117 {strides = array<i32>} : memref<8x2x32xf32, #tpu.memory_space<vmem>>, vector<1x2x32xf32>,
    %118 = vector.extract_strided_slice %17 {offsets = [2, 0, 0], sizes = [1, 2, 128], strides = [1, 1, 1]} : vector<8x2x128xf32> to vector<1x2x128xf32>
    %119 = vector.shape_cast %118 : vector<1x2x128xf32> to vector<2x128xf32>
    %cst_49 = arith.constant dense<0.000000e+00> : vector<2x128xf32>
    %120 = tpu.matmul %92, %3, %cst_49 {dimension_numbers = #tpu.dot_dimension_numbers<[1], [0], [0], [1], [0, 0, 1, 1], [], []>} : vector<2x32xf32>, vector<32x128xf32>, vector<2x128xf32> -> vector<2x128xf32>
    %121 = arith.addf %119, %120 : vector<2x128xf32>
    %cst_50 = arith.constant 5.000000e-01 : f32
    %122 = vector.broadcast %cst_50 : f32 to vector<2x128xf32>
    %123 = arith.mulf %122, %121 : vector<2x128xf32>
    %124 = math.tanh %123 : vector<2x128xf32>
    %cst_51 = arith.constant 1.000000e+00 : f32
    %125 = vector.broadcast %cst_51 : f32 to vector<2x128xf32>
    %126 = arith.addf %124, %125 : vector<2x128xf32>
    %cst_52 = arith.constant 5.000000e-01 : f32
    %127 = vector.broadcast %cst_52 : f32 to vector<2x128xf32>
    %128 = arith.mulf %127, %126 : vector<2x128xf32>
    %129 = math.tanh %121 : vector<2x128xf32>
    %130 = vector.extract_strided_slice %128 {offsets = [0, 0], sizes = [2, 32], strides = [1, 1]} : vector<2x128xf32> to vector<2x32xf32>
    %131 = vector.extract_strided_slice %128 {offsets = [0, 32], sizes = [2, 32], strides = [1, 1]} : vector<2x128xf32> to vector<2x32xf32>
    %132 = vector.extract_strided_slice %129 {offsets = [0, 64], sizes = [2, 32], strides = [1, 1]} : vector<2x128xf32> to vector<2x32xf32>
    %133 = vector.extract_strided_slice %128 {offsets = [0, 96], sizes = [2, 32], strides = [1, 1]} : vector<2x128xf32> to vector<2x32xf32>
    %134 = arith.mulf %131, %90 : vector<2x32xf32>
    %135 = arith.mulf %130, %132 : vector<2x32xf32>
    %136 = arith.addf %134, %135 : vector<2x32xf32>
    %137 = math.tanh %136 : vector<2x32xf32>
    %138 = arith.mulf %133, %137 : vector<2x32xf32>
    %cst_53 = arith.constant dense<0.000000e+00> : vector<2x128xf32>
    %139 = tpu.matmul %138, %8, %cst_53 {dimension_numbers = #tpu.dot_dimension_numbers<[1], [0], [0], [1], [0, 0, 1, 1], [], []>} : vector<2x32xf32>, vector<32x128xf32>, vector<2x128xf32> -> vector<2x128xf32>
    %140 = vector.broadcast %11 : vector<1x128xf32> to vector<2x128xf32>
    %141 = arith.addf %139, %140 : vector<2x128xf32>
    %cst_54 = arith.constant dense<0.000000e+00> : vector<2x128xf32>
    %142 = tpu.matmul %114, %9, %cst_54 {dimension_numbers = #tpu.dot_dimension_numbers<[1], [0], [0], [1], [0, 0, 1, 1], [], []>} : vector<2x32xf32>, vector<32x128xf32>, vector<2x128xf32> -> vector<2x128xf32>
    %143 = arith.addf %141, %142 : vector<2x128xf32>
    %cst_55 = arith.constant 5.000000e-01 : f32
    %144 = vector.broadcast %cst_55 : f32 to vector<2x128xf32>
    %145 = arith.mulf %144, %143 : vector<2x128xf32>
    %146 = math.tanh %145 : vector<2x128xf32>
    %cst_56 = arith.constant 1.000000e+00 : f32
    %147 = vector.broadcast %cst_56 : f32 to vector<2x128xf32>
    %148 = arith.addf %146, %147 : vector<2x128xf32>
    %cst_57 = arith.constant 5.000000e-01 : f32
    %149 = vector.broadcast %cst_57 : f32 to vector<2x128xf32>
    %150 = arith.mulf %149, %148 : vector<2x128xf32>
    %151 = math.tanh %143 : vector<2x128xf32>
    %152 = vector.extract_strided_slice %150 {offsets = [0, 0], sizes = [2, 32], strides = [1, 1]} : vector<2x128xf32> to vector<2x32xf32>
    %153 = vector.extract_strided_slice %150 {offsets = [0, 32], sizes = [2, 32], strides = [1, 1]} : vector<2x128xf32> to vector<2x32xf32>
    %154 = vector.extract_strided_slice %151 {offsets = [0, 64], sizes = [2, 32], strides = [1, 1]} : vector<2x128xf32> to vector<2x32xf32>
    %155 = vector.extract_strided_slice %150 {offsets = [0, 96], sizes = [2, 32], strides = [1, 1]} : vector<2x128xf32> to vector<2x32xf32>
    %156 = arith.mulf %153, %112 : vector<2x32xf32>
    %157 = arith.mulf %152, %154 : vector<2x32xf32>
    %158 = arith.addf %156, %157 : vector<2x32xf32>
    %159 = math.tanh %158 : vector<2x32xf32>
    %160 = arith.mulf %155, %159 : vector<2x32xf32>
    %c2 = arith.constant 2 : index
    %c0_58 = arith.constant 0 : index
    %c0_59 = arith.constant 0 : index
    %161 = vector.load %arg10[%c2, %c0_58, %c0_59] : memref<8x2x32xf32, #tpu.memory_space<vmem>>, vector<1x2x32xf32>
    %162 = vector.shape_cast %161 : vector<1x2x32xf32> to vector<2x32xf32>
    %163 = vector.shape_cast %160 : vector<2x32xf32> to vector<1x2x32xf32>
    tpu.vector_store %arg10[%c2, %c0_58, %c0_59], %163 {strides = array<i32>} : memref<8x2x32xf32, #tpu.memory_space<vmem>>, vector<1x2x32xf32>,
    %164 = vector.extract_strided_slice %17 {offsets = [3, 0, 0], sizes = [1, 2, 128], strides = [1, 1, 1]} : vector<8x2x128xf32> to vector<1x2x128xf32>
    %165 = vector.shape_cast %164 : vector<1x2x128xf32> to vector<2x128xf32>
    %cst_60 = arith.constant dense<0.000000e+00> : vector<2x128xf32>
    %166 = tpu.matmul %138, %3, %cst_60 {dimension_numbers = #tpu.dot_dimension_numbers<[1], [0], [0], [1], [0, 0, 1, 1], [], []>} : vector<2x32xf32>, vector<32x128xf32>, vector<2x128xf32> -> vector<2x128xf32>
    %167 = arith.addf %165, %166 : vector<2x128xf32>
    %cst_61 = arith.constant 5.000000e-01 : f32
    %168 = vector.broadcast %cst_61 : f32 to vector<2x128xf32>
    %169 = arith.mulf %168, %167 : vector<2x128xf32>
    %170 = math.tanh %169 : vector<2x128xf32>
    %cst_62 = arith.constant 1.000000e+00 : f32
    %171 = vector.broadcast %cst_62 : f32 to vector<2x128xf32>
    %172 = arith.addf %170, %171 : vector<2x128xf32>
    %cst_63 = arith.constant 5.000000e-01 : f32
    %173 = vector.broadcast %cst_63 : f32 to vector<2x128xf32>
    %174 = arith.mulf %173, %172 : vector<2x128xf32>
    %175 = math.tanh %167 : vector<2x128xf32>
    %176 = vector.extract_strided_slice %174 {offsets = [0, 0], sizes = [2, 32], strides = [1, 1]} : vector<2x128xf32> to vector<2x32xf32>
    %177 = vector.extract_strided_slice %174 {offsets = [0, 32], sizes = [2, 32], strides = [1, 1]} : vector<2x128xf32> to vector<2x32xf32>
    %178 = vector.extract_strided_slice %175 {offsets = [0, 64], sizes = [2, 32], strides = [1, 1]} : vector<2x128xf32> to vector<2x32xf32>
    %179 = vector.extract_strided_slice %174 {offsets = [0, 96], sizes = [2, 32], strides = [1, 1]} : vector<2x128xf32> to vector<2x32xf32>
    %180 = arith.mulf %177, %136 : vector<2x32xf32>
    %181 = arith.mulf %176, %178 : vector<2x32xf32>
    %182 = arith.addf %180, %181 : vector<2x32xf32>
    %183 = math.tanh %182 : vector<2x32xf32>
    %184 = arith.mulf %179, %183 : vector<2x32xf32>
    %cst_64 = arith.constant dense<0.000000e+00> : vector<2x128xf32>
    %185 = tpu.matmul %184, %8, %cst_64 {dimension_numbers = #tpu.dot_dimension_numbers<[1], [0], [0], [1], [0, 0, 1, 1], [], []>} : vector<2x32xf32>, vector<32x128xf32>, vector<2x128xf32> -> vector<2x128xf32>
    %186 = vector.broadcast %11 : vector<1x128xf32> to vector<2x128xf32>
    %187 = arith.addf %185, %186 : vector<2x128xf32>
    %cst_65 = arith.constant dense<0.000000e+00> : vector<2x128xf32>
    %188 = tpu.matmul %160, %9, %cst_65 {dimension_numbers = #tpu.dot_dimension_numbers<[1], [0], [0], [1], [0, 0, 1, 1], [], []>} : vector<2x32xf32>, vector<32x128xf32>, vector<2x128xf32> -> vector<2x128xf32>
    %189 = arith.addf %187, %188 : vector<2x128xf32>
    %cst_66 = arith.constant 5.000000e-01 : f32
    %190 = vector.broadcast %cst_66 : f32 to vector<2x128xf32>
    %191 = arith.mulf %190, %189 : vector<2x128xf32>
    %192 = math.tanh %191 : vector<2x128xf32>
    %cst_67 = arith.constant 1.000000e+00 : f32
    %193 = vector.broadcast %cst_67 : f32 to vector<2x128xf32>
    %194 = arith.addf %192, %193 : vector<2x128xf32>
    %cst_68 = arith.constant 5.000000e-01 : f32
    %195 = vector.broadcast %cst_68 : f32 to vector<2x128xf32>
    %196 = arith.mulf %195, %194 : vector<2x128xf32>
    %197 = math.tanh %189 : vector<2x128xf32>
    %198 = vector.extract_strided_slice %196 {offsets = [0, 0], sizes = [2, 32], strides = [1, 1]} : vector<2x128xf32> to vector<2x32xf32>
    %199 = vector.extract_strided_slice %196 {offsets = [0, 32], sizes = [2, 32], strides = [1, 1]} : vector<2x128xf32> to vector<2x32xf32>
    %200 = vector.extract_strided_slice %197 {offsets = [0, 64], sizes = [2, 32], strides = [1, 1]} : vector<2x128xf32> to vector<2x32xf32>
    %201 = vector.extract_strided_slice %196 {offsets = [0, 96], sizes = [2, 32], strides = [1, 1]} : vector<2x128xf32> to vector<2x32xf32>
    %202 = arith.mulf %199, %158 : vector<2x32xf32>
    %203 = arith.mulf %198, %200 : vector<2x32xf32>
    %204 = arith.addf %202, %203 : vector<2x32xf32>
    %205 = math.tanh %204 : vector<2x32xf32>
    %206 = arith.mulf %201, %205 : vector<2x32xf32>
    %c3 = arith.constant 3 : index
    %c0_69 = arith.constant 0 : index
    %c0_70 = arith.constant 0 : index
    %207 = vector.load %arg10[%c3, %c0_69, %c0_70] : memref<8x2x32xf32, #tpu.memory_space<vmem>>, vector<1x2x32xf32>
    %208 = vector.shape_cast %207 : vector<1x2x32xf32> to vector<2x32xf32>
    %209 = vector.shape_cast %206 : vector<2x32xf32> to vector<1x2x32xf32>
    tpu.vector_store %arg10[%c3, %c0_69, %c0_70], %209 {strides = array<i32>} : memref<8x2x32xf32, #tpu.memory_space<vmem>>, vector<1x2x32xf32>,
    %210 = vector.extract_strided_slice %17 {offsets = [4, 0, 0], sizes = [1, 2, 128], strides = [1, 1, 1]} : vector<8x2x128xf32> to vector<1x2x128xf32>
    %211 = vector.shape_cast %210 : vector<1x2x128xf32> to vector<2x128xf32>
    %cst_71 = arith.constant dense<0.000000e+00> : vector<2x128xf32>
    %212 = tpu.matmul %184, %3, %cst_71 {dimension_numbers = #tpu.dot_dimension_numbers<[1], [0], [0], [1], [0, 0, 1, 1], [], []>} : vector<2x32xf32>, vector<32x128xf32>, vector<2x128xf32> -> vector<2x128xf32>
    %213 = arith.addf %211, %212 : vector<2x128xf32>
    %cst_72 = arith.constant 5.000000e-01 : f32
    %214 = vector.broadcast %cst_72 : f32 to vector<2x128xf32>
    %215 = arith.mulf %214, %213 : vector<2x128xf32>
    %216 = math.tanh %215 : vector<2x128xf32>
    %cst_73 = arith.constant 1.000000e+00 : f32
    %217 = vector.broadcast %cst_73 : f32 to vector<2x128xf32>
    %218 = arith.addf %216, %217 : vector<2x128xf32>
    %cst_74 = arith.constant 5.000000e-01 : f32
    %219 = vector.broadcast %cst_74 : f32 to vector<2x128xf32>
    %220 = arith.mulf %219, %218 : vector<2x128xf32>
    %221 = math.tanh %213 : vector<2x128xf32>
    %222 = vector.extract_strided_slice %220 {offsets = [0, 0], sizes = [2, 32], strides = [1, 1]} : vector<2x128xf32> to vector<2x32xf32>
    %223 = vector.extract_strided_slice %220 {offsets = [0, 32], sizes = [2, 32], strides = [1, 1]} : vector<2x128xf32> to vector<2x32xf32>
    %224 = vector.extract_strided_slice %221 {offsets = [0, 64], sizes = [2, 32], strides = [1, 1]} : vector<2x128xf32> to vector<2x32xf32>
    %225 = vector.extract_strided_slice %220 {offsets = [0, 96], sizes = [2, 32], strides = [1, 1]} : vector<2x128xf32> to vector<2x32xf32>
    %226 = arith.mulf %223, %182 : vector<2x32xf32>
    %227 = arith.mulf %222, %224 : vector<2x32xf32>
    %228 = arith.addf %226, %227 : vector<2x32xf32>
    %229 = math.tanh %228 : vector<2x32xf32>
    %230 = arith.mulf %225, %229 : vector<2x32xf32>
    %cst_75 = arith.constant dense<0.000000e+00> : vector<2x128xf32>
    %231 = tpu.matmul %230, %8, %cst_75 {dimension_numbers = #tpu.dot_dimension_numbers<[1], [0], [0], [1], [0, 0, 1, 1], [], []>} : vector<2x32xf32>, vector<32x128xf32>, vector<2x128xf32> -> vector<2x128xf32>
    %232 = vector.broadcast %11 : vector<1x128xf32> to vector<2x128xf32>
    %233 = arith.addf %231, %232 : vector<2x128xf32>
    %cst_76 = arith.constant dense<0.000000e+00> : vector<2x128xf32>
    %234 = tpu.matmul %206, %9, %cst_76 {dimension_numbers = #tpu.dot_dimension_numbers<[1], [0], [0], [1], [0, 0, 1, 1], [], []>} : vector<2x32xf32>, vector<32x128xf32>, vector<2x128xf32> -> vector<2x128xf32>
    %235 = arith.addf %233, %234 : vector<2x128xf32>
    %cst_77 = arith.constant 5.000000e-01 : f32
    %236 = vector.broadcast %cst_77 : f32 to vector<2x128xf32>
    %237 = arith.mulf %236, %235 : vector<2x128xf32>
    %238 = math.tanh %237 : vector<2x128xf32>
    %cst_78 = arith.constant 1.000000e+00 : f32
    %239 = vector.broadcast %cst_78 : f32 to vector<2x128xf32>
    %240 = arith.addf %238, %239 : vector<2x128xf32>
    %cst_79 = arith.constant 5.000000e-01 : f32
    %241 = vector.broadcast %cst_79 : f32 to vector<2x128xf32>
    %242 = arith.mulf %241, %240 : vector<2x128xf32>
    %243 = math.tanh %235 : vector<2x128xf32>
    %244 = vector.extract_strided_slice %242 {offsets = [0, 0], sizes = [2, 32], strides = [1, 1]} : vector<2x128xf32> to vector<2x32xf32>
    %245 = vector.extract_strided_slice %242 {offsets = [0, 32], sizes = [2, 32], strides = [1, 1]} : vector<2x128xf32> to vector<2x32xf32>
    %246 = vector.extract_strided_slice %243 {offsets = [0, 64], sizes = [2, 32], strides = [1, 1]} : vector<2x128xf32> to vector<2x32xf32>
    %247 = vector.extract_strided_slice %242 {offsets = [0, 96], sizes = [2, 32], strides = [1, 1]} : vector<2x128xf32> to vector<2x32xf32>
    %248 = arith.mulf %245, %204 : vector<2x32xf32>
    %249 = arith.mulf %244, %246 : vector<2x32xf32>
    %250 = arith.addf %248, %249 : vector<2x32xf32>
    %251 = math.tanh %250 : vector<2x32xf32>
    %252 = arith.mulf %247, %251 : vector<2x32xf32>
    %c4 = arith.constant 4 : index
    %c0_80 = arith.constant 0 : index
    %c0_81 = arith.constant 0 : index
    %253 = vector.load %arg10[%c4, %c0_80, %c0_81] : memref<8x2x32xf32, #tpu.memory_space<vmem>>, vector<1x2x32xf32>
    %254 = vector.shape_cast %253 : vector<1x2x32xf32> to vector<2x32xf32>
    %255 = vector.shape_cast %252 : vector<2x32xf32> to vector<1x2x32xf32>
    tpu.vector_store %arg10[%c4, %c0_80, %c0_81], %255 {strides = array<i32>} : memref<8x2x32xf32, #tpu.memory_space<vmem>>, vector<1x2x32xf32>,
    %256 = vector.extract_strided_slice %17 {offsets = [5, 0, 0], sizes = [1, 2, 128], strides = [1, 1, 1]} : vector<8x2x128xf32> to vector<1x2x128xf32>
    %257 = vector.shape_cast %256 : vector<1x2x128xf32> to vector<2x128xf32>
    %cst_82 = arith.constant dense<0.000000e+00> : vector<2x128xf32>
    %258 = tpu.matmul %230, %3, %cst_82 {dimension_numbers = #tpu.dot_dimension_numbers<[1], [0], [0], [1], [0, 0, 1, 1], [], []>} : vector<2x32xf32>, vector<32x128xf32>, vector<2x128xf32> -> vector<2x128xf32>
    %259 = arith.addf %257, %258 : vector<2x128xf32>
    %cst_83 = arith.constant 5.000000e-01 : f32
    %260 = vector.broadcast %cst_83 : f32 to vector<2x128xf32>
    %261 = arith.mulf %260, %259 : vector<2x128xf32>
    %262 = math.tanh %261 : vector<2x128xf32>
    %cst_84 = arith.constant 1.000000e+00 : f32
    %263 = vector.broadcast %cst_84 : f32 to vector<2x128xf32>
    %264 = arith.addf %262, %263 : vector<2x128xf32>
    %cst_85 = arith.constant 5.000000e-01 : f32
    %265 = vector.broadcast %cst_85 : f32 to vector<2x128xf32>
    %266 = arith.mulf %265, %264 : vector<2x128xf32>
    %267 = math.tanh %259 : vector<2x128xf32>
    %268 = vector.extract_strided_slice %266 {offsets = [0, 0], sizes = [2, 32], strides = [1, 1]} : vector<2x128xf32> to vector<2x32xf32>
    %269 = vector.extract_strided_slice %266 {offsets = [0, 32], sizes = [2, 32], strides = [1, 1]} : vector<2x128xf32> to vector<2x32xf32>
    %270 = vector.extract_strided_slice %267 {offsets = [0, 64], sizes = [2, 32], strides = [1, 1]} : vector<2x128xf32> to vector<2x32xf32>
    %271 = vector.extract_strided_slice %266 {offsets = [0, 96], sizes = [2, 32], strides = [1, 1]} : vector<2x128xf32> to vector<2x32xf32>
    %272 = arith.mulf %269, %228 : vector<2x32xf32>
    %273 = arith.mulf %268, %270 : vector<2x32xf32>
    %274 = arith.addf %272, %273 : vector<2x32xf32>
    %275 = math.tanh %274 : vector<2x32xf32>
    %276 = arith.mulf %271, %275 : vector<2x32xf32>
    %cst_86 = arith.constant dense<0.000000e+00> : vector<2x128xf32>
    %277 = tpu.matmul %276, %8, %cst_86 {dimension_numbers = #tpu.dot_dimension_numbers<[1], [0], [0], [1], [0, 0, 1, 1], [], []>} : vector<2x32xf32>, vector<32x128xf32>, vector<2x128xf32> -> vector<2x128xf32>
    %278 = vector.broadcast %11 : vector<1x128xf32> to vector<2x128xf32>
    %279 = arith.addf %277, %278 : vector<2x128xf32>
    %cst_87 = arith.constant dense<0.000000e+00> : vector<2x128xf32>
    %280 = tpu.matmul %252, %9, %cst_87 {dimension_numbers = #tpu.dot_dimension_numbers<[1], [0], [0], [1], [0, 0, 1, 1], [], []>} : vector<2x32xf32>, vector<32x128xf32>, vector<2x128xf32> -> vector<2x128xf32>
    %281 = arith.addf %279, %280 : vector<2x128xf32>
    %cst_88 = arith.constant 5.000000e-01 : f32
    %282 = vector.broadcast %cst_88 : f32 to vector<2x128xf32>
    %283 = arith.mulf %282, %281 : vector<2x128xf32>
    %284 = math.tanh %283 : vector<2x128xf32>
    %cst_89 = arith.constant 1.000000e+00 : f32
    %285 = vector.broadcast %cst_89 : f32 to vector<2x128xf32>
    %286 = arith.addf %284, %285 : vector<2x128xf32>
    %cst_90 = arith.constant 5.000000e-01 : f32
    %287 = vector.broadcast %cst_90 : f32 to vector<2x128xf32>
    %288 = arith.mulf %287, %286 : vector<2x128xf32>
    %289 = math.tanh %281 : vector<2x128xf32>
    %290 = vector.extract_strided_slice %288 {offsets = [0, 0], sizes = [2, 32], strides = [1, 1]} : vector<2x128xf32> to vector<2x32xf32>
    %291 = vector.extract_strided_slice %288 {offsets = [0, 32], sizes = [2, 32], strides = [1, 1]} : vector<2x128xf32> to vector<2x32xf32>
    %292 = vector.extract_strided_slice %289 {offsets = [0, 64], sizes = [2, 32], strides = [1, 1]} : vector<2x128xf32> to vector<2x32xf32>
    %293 = vector.extract_strided_slice %288 {offsets = [0, 96], sizes = [2, 32], strides = [1, 1]} : vector<2x128xf32> to vector<2x32xf32>
    %294 = arith.mulf %291, %250 : vector<2x32xf32>
    %295 = arith.mulf %290, %292 : vector<2x32xf32>
    %296 = arith.addf %294, %295 : vector<2x32xf32>
    %297 = math.tanh %296 : vector<2x32xf32>
    %298 = arith.mulf %293, %297 : vector<2x32xf32>
    %c5 = arith.constant 5 : index
    %c0_91 = arith.constant 0 : index
    %c0_92 = arith.constant 0 : index
    %299 = vector.load %arg10[%c5, %c0_91, %c0_92] : memref<8x2x32xf32, #tpu.memory_space<vmem>>, vector<1x2x32xf32>
    %300 = vector.shape_cast %299 : vector<1x2x32xf32> to vector<2x32xf32>
    %301 = vector.shape_cast %298 : vector<2x32xf32> to vector<1x2x32xf32>
    tpu.vector_store %arg10[%c5, %c0_91, %c0_92], %301 {strides = array<i32>} : memref<8x2x32xf32, #tpu.memory_space<vmem>>, vector<1x2x32xf32>,
    %302 = vector.extract_strided_slice %17 {offsets = [6, 0, 0], sizes = [1, 2, 128], strides = [1, 1, 1]} : vector<8x2x128xf32> to vector<1x2x128xf32>
    %303 = vector.shape_cast %302 : vector<1x2x128xf32> to vector<2x128xf32>
    %cst_93 = arith.constant dense<0.000000e+00> : vector<2x128xf32>
    %304 = tpu.matmul %276, %3, %cst_93 {dimension_numbers = #tpu.dot_dimension_numbers<[1], [0], [0], [1], [0, 0, 1, 1], [], []>} : vector<2x32xf32>, vector<32x128xf32>, vector<2x128xf32> -> vector<2x128xf32>
    %305 = arith.addf %303, %304 : vector<2x128xf32>
    %cst_94 = arith.constant 5.000000e-01 : f32
    %306 = vector.broadcast %cst_94 : f32 to vector<2x128xf32>
    %307 = arith.mulf %306, %305 : vector<2x128xf32>
    %308 = math.tanh %307 : vector<2x128xf32>
    %cst_95 = arith.constant 1.000000e+00 : f32
    %309 = vector.broadcast %cst_95 : f32 to vector<2x128xf32>
    %310 = arith.addf %308, %309 : vector<2x128xf32>
    %cst_96 = arith.constant 5.000000e-01 : f32
    %311 = vector.broadcast %cst_96 : f32 to vector<2x128xf32>
    %312 = arith.mulf %311, %310 : vector<2x128xf32>
    %313 = math.tanh %305 : vector<2x128xf32>
    %314 = vector.extract_strided_slice %312 {offsets = [0, 0], sizes = [2, 32], strides = [1, 1]} : vector<2x128xf32> to vector<2x32xf32>
    %315 = vector.extract_strided_slice %312 {offsets = [0, 32], sizes = [2, 32], strides = [1, 1]} : vector<2x128xf32> to vector<2x32xf32>
    %316 = vector.extract_strided_slice %313 {offsets = [0, 64], sizes = [2, 32], strides = [1, 1]} : vector<2x128xf32> to vector<2x32xf32>
    %317 = vector.extract_strided_slice %312 {offsets = [0, 96], sizes = [2, 32], strides = [1, 1]} : vector<2x128xf32> to vector<2x32xf32>
    %318 = arith.mulf %315, %274 : vector<2x32xf32>
    %319 = arith.mulf %314, %316 : vector<2x32xf32>
    %320 = arith.addf %318, %319 : vector<2x32xf32>
    %321 = math.tanh %320 : vector<2x32xf32>
    %322 = arith.mulf %317, %321 : vector<2x32xf32>
    %cst_97 = arith.constant dense<0.000000e+00> : vector<2x128xf32>
    %323 = tpu.matmul %322, %8, %cst_97 {dimension_numbers = #tpu.dot_dimension_numbers<[1], [0], [0], [1], [0, 0, 1, 1], [], []>} : vector<2x32xf32>, vector<32x128xf32>, vector<2x128xf32> -> vector<2x128xf32>
    %324 = vector.broadcast %11 : vector<1x128xf32> to vector<2x128xf32>
    %325 = arith.addf %323, %324 : vector<2x128xf32>
    %cst_98 = arith.constant dense<0.000000e+00> : vector<2x128xf32>
    %326 = tpu.matmul %298, %9, %cst_98 {dimension_numbers = #tpu.dot_dimension_numbers<[1], [0], [0], [1], [0, 0, 1, 1], [], []>} : vector<2x32xf32>, vector<32x128xf32>, vector<2x128xf32> -> vector<2x128xf32>
    %327 = arith.addf %325, %326 : vector<2x128xf32>
    %cst_99 = arith.constant 5.000000e-01 : f32
    %328 = vector.broadcast %cst_99 : f32 to vector<2x128xf32>
    %329 = arith.mulf %328, %327 : vector<2x128xf32>
    %330 = math.tanh %329 : vector<2x128xf32>
    %cst_100 = arith.constant 1.000000e+00 : f32
    %331 = vector.broadcast %cst_100 : f32 to vector<2x128xf32>
    %332 = arith.addf %330, %331 : vector<2x128xf32>
    %cst_101 = arith.constant 5.000000e-01 : f32
    %333 = vector.broadcast %cst_101 : f32 to vector<2x128xf32>
    %334 = arith.mulf %333, %332 : vector<2x128xf32>
    %335 = math.tanh %327 : vector<2x128xf32>
    %336 = vector.extract_strided_slice %334 {offsets = [0, 0], sizes = [2, 32], strides = [1, 1]} : vector<2x128xf32> to vector<2x32xf32>
    %337 = vector.extract_strided_slice %334 {offsets = [0, 32], sizes = [2, 32], strides = [1, 1]} : vector<2x128xf32> to vector<2x32xf32>
    %338 = vector.extract_strided_slice %335 {offsets = [0, 64], sizes = [2, 32], strides = [1, 1]} : vector<2x128xf32> to vector<2x32xf32>
    %339 = vector.extract_strided_slice %334 {offsets = [0, 96], sizes = [2, 32], strides = [1, 1]} : vector<2x128xf32> to vector<2x32xf32>
    %340 = arith.mulf %337, %296 : vector<2x32xf32>
    %341 = arith.mulf %336, %338 : vector<2x32xf32>
    %342 = arith.addf %340, %341 : vector<2x32xf32>
    %343 = math.tanh %342 : vector<2x32xf32>
    %344 = arith.mulf %339, %343 : vector<2x32xf32>
    %c6 = arith.constant 6 : index
    %c0_102 = arith.constant 0 : index
    %c0_103 = arith.constant 0 : index
    %345 = vector.load %arg10[%c6, %c0_102, %c0_103] : memref<8x2x32xf32, #tpu.memory_space<vmem>>, vector<1x2x32xf32>
    %346 = vector.shape_cast %345 : vector<1x2x32xf32> to vector<2x32xf32>
    %347 = vector.shape_cast %344 : vector<2x32xf32> to vector<1x2x32xf32>
    tpu.vector_store %arg10[%c6, %c0_102, %c0_103], %347 {strides = array<i32>} : memref<8x2x32xf32, #tpu.memory_space<vmem>>, vector<1x2x32xf32>,
    %348 = vector.extract_strided_slice %17 {offsets = [7, 0, 0], sizes = [1, 2, 128], strides = [1, 1, 1]} : vector<8x2x128xf32> to vector<1x2x128xf32>
    %349 = vector.shape_cast %348 : vector<1x2x128xf32> to vector<2x128xf32>
    %cst_104 = arith.constant dense<0.000000e+00> : vector<2x128xf32>
    %350 = tpu.matmul %322, %3, %cst_104 {dimension_numbers = #tpu.dot_dimension_numbers<[1], [0], [0], [1], [0, 0, 1, 1], [], []>} : vector<2x32xf32>, vector<32x128xf32>, vector<2x128xf32> -> vector<2x128xf32>
    %351 = arith.addf %349, %350 : vector<2x128xf32>
    %cst_105 = arith.constant 5.000000e-01 : f32
    %352 = vector.broadcast %cst_105 : f32 to vector<2x128xf32>
    %353 = arith.mulf %352, %351 : vector<2x128xf32>
    %354 = math.tanh %353 : vector<2x128xf32>
    %cst_106 = arith.constant 1.000000e+00 : f32
    %355 = vector.broadcast %cst_106 : f32 to vector<2x128xf32>
    %356 = arith.addf %354, %355 : vector<2x128xf32>
    %cst_107 = arith.constant 5.000000e-01 : f32
    %357 = vector.broadcast %cst_107 : f32 to vector<2x128xf32>
    %358 = arith.mulf %357, %356 : vector<2x128xf32>
    %359 = math.tanh %351 : vector<2x128xf32>
    %360 = vector.extract_strided_slice %358 {offsets = [0, 0], sizes = [2, 32], strides = [1, 1]} : vector<2x128xf32> to vector<2x32xf32>
    %361 = vector.extract_strided_slice %358 {offsets = [0, 32], sizes = [2, 32], strides = [1, 1]} : vector<2x128xf32> to vector<2x32xf32>
    %362 = vector.extract_strided_slice %359 {offsets = [0, 64], sizes = [2, 32], strides = [1, 1]} : vector<2x128xf32> to vector<2x32xf32>
    %363 = vector.extract_strided_slice %358 {offsets = [0, 96], sizes = [2, 32], strides = [1, 1]} : vector<2x128xf32> to vector<2x32xf32>
    %364 = arith.mulf %361, %320 : vector<2x32xf32>
    %365 = arith.mulf %360, %362 : vector<2x32xf32>
    %366 = arith.addf %364, %365 : vector<2x32xf32>
    %367 = math.tanh %366 : vector<2x32xf32>
    %368 = arith.mulf %363, %367 : vector<2x32xf32>
    %cst_108 = arith.constant dense<0.000000e+00> : vector<2x128xf32>
    %369 = tpu.matmul %368, %8, %cst_108 {dimension_numbers = #tpu.dot_dimension_numbers<[1], [0], [0], [1], [0, 0, 1, 1], [], []>} : vector<2x32xf32>, vector<32x128xf32>, vector<2x128xf32> -> vector<2x128xf32>
    %370 = vector.broadcast %11 : vector<1x128xf32> to vector<2x128xf32>
    %371 = arith.addf %369, %370 : vector<2x128xf32>
    %cst_109 = arith.constant dense<0.000000e+00> : vector<2x128xf32>
    %372 = tpu.matmul %344, %9, %cst_109 {dimension_numbers = #tpu.dot_dimension_numbers<[1], [0], [0], [1], [0, 0, 1, 1], [], []>} : vector<2x32xf32>, vector<32x128xf32>, vector<2x128xf32> -> vector<2x128xf32>
    %373 = arith.addf %371, %372 : vector<2x128xf32>
    %cst_110 = arith.constant 5.000000e-01 : f32
    %374 = vector.broadcast %cst_110 : f32 to vector<2x128xf32>
    %375 = arith.mulf %374, %373 : vector<2x128xf32>
    %376 = math.tanh %375 : vector<2x128xf32>
    %cst_111 = arith.constant 1.000000e+00 : f32
    %377 = vector.broadcast %cst_111 : f32 to vector<2x128xf32>
    %378 = arith.addf %376, %377 : vector<2x128xf32>
    %cst_112 = arith.constant 5.000000e-01 : f32
    %379 = vector.broadcast %cst_112 : f32 to vector<2x128xf32>
    %380 = arith.mulf %379, %378 : vector<2x128xf32>
    %381 = math.tanh %373 : vector<2x128xf32>
    %382 = vector.extract_strided_slice %380 {offsets = [0, 0], sizes = [2, 32], strides = [1, 1]} : vector<2x128xf32> to vector<2x32xf32>
    %383 = vector.extract_strided_slice %380 {offsets = [0, 32], sizes = [2, 32], strides = [1, 1]} : vector<2x128xf32> to vector<2x32xf32>
    %384 = vector.extract_strided_slice %381 {offsets = [0, 64], sizes = [2, 32], strides = [1, 1]} : vector<2x128xf32> to vector<2x32xf32>
    %385 = vector.extract_strided_slice %380 {offsets = [0, 96], sizes = [2, 32], strides = [1, 1]} : vector<2x128xf32> to vector<2x32xf32>
    %386 = arith.mulf %383, %342 : vector<2x32xf32>
    %387 = arith.mulf %382, %384 : vector<2x32xf32>
    %388 = arith.addf %386, %387 : vector<2x32xf32>
    %389 = math.tanh %388 : vector<2x32xf32>
    %390 = arith.mulf %385, %389 : vector<2x32xf32>
    %c7 = arith.constant 7 : index
    %c0_113 = arith.constant 0 : index
    %c0_114 = arith.constant 0 : index
    %391 = vector.load %arg10[%c7, %c0_113, %c0_114] : memref<8x2x32xf32, #tpu.memory_space<vmem>>, vector<1x2x32xf32>
    %392 = vector.shape_cast %391 : vector<1x2x32xf32> to vector<2x32xf32>
    %393 = vector.shape_cast %390 : vector<2x32xf32> to vector<1x2x32xf32>
    tpu.vector_store %arg10[%c7, %c0_113, %c0_114], %393 {strides = array<i32>} : memref<8x2x32xf32, #tpu.memory_space<vmem>>, vector<1x2x32xf32>,
    %c0_115 = arith.constant 0 : index
    %c0_116 = arith.constant 0 : index
    %c0_117 = arith.constant 0 : index
    %394 = vector.load %arg8[%c0_115, %c0_116, %c0_117] : memref<2x2x32xf32, #tpu.memory_space<vmem>>, vector<1x2x32xf32>
    %395 = vector.shape_cast %394 : vector<1x2x32xf32> to vector<2x32xf32>
    %396 = vector.shape_cast %368 : vector<2x32xf32> to vector<1x2x32xf32>
    tpu.vector_store %arg8[%c0_115, %c0_116, %c0_117], %396 {strides = array<i32>} : memref<2x2x32xf32, #tpu.memory_space<vmem>>, vector<1x2x32xf32>,
    %c0_118 = arith.constant 0 : index
    %c0_119 = arith.constant 0 : index
    %c0_120 = arith.constant 0 : index
    %397 = vector.load %arg9[%c0_118, %c0_119, %c0_120] : memref<2x2x32xf32, #tpu.memory_space<vmem>>, vector<1x2x32xf32>
    %398 = vector.shape_cast %397 : vector<1x2x32xf32> to vector<2x32xf32>
    %399 = vector.shape_cast %366 : vector<2x32xf32> to vector<1x2x32xf32>
    tpu.vector_store %arg9[%c0_118, %c0_119, %c0_120], %399 {strides = array<i32>} : memref<2x2x32xf32, #tpu.memory_space<vmem>>, vector<1x2x32xf32>,
    %c1_121 = arith.constant 1 : index
    %c0_122 = arith.constant 0 : index
    %c0_123 = arith.constant 0 : index
    %400 = vector.load %arg8[%c1_121, %c0_122, %c0_123] : memref<2x2x32xf32, #tpu.memory_space<vmem>>, vector<1x2x32xf32>
    %401 = vector.shape_cast %400 : vector<1x2x32xf32> to vector<2x32xf32>
    %402 = vector.shape_cast %390 : vector<2x32xf32> to vector<1x2x32xf32>
    tpu.vector_store %arg8[%c1_121, %c0_122, %c0_123], %402 {strides = array<i32>} : memref<2x2x32xf32, #tpu.memory_space<vmem>>, vector<1x2x32xf32>,
    %c1_124 = arith.constant 1 : index
    %c0_125 = arith.constant 0 : index
    %c0_126 = arith.constant 0 : index
    %403 = vector.load %arg9[%c1_124, %c0_125, %c0_126] : memref<2x2x32xf32, #tpu.memory_space<vmem>>, vector<1x2x32xf32>
    %404 = vector.shape_cast %403 : vector<1x2x32xf32> to vector<2x32xf32>
    %405 = vector.shape_cast %388 : vector<2x32xf32> to vector<1x2x32xf32>
    tpu.vector_store %arg9[%c1_124, %c0_125, %c0_126], %405 {strides = array<i32>} : memref<2x2x32xf32, #tpu.memory_space<vmem>>, vector<1x2x32xf32>,
    %c0_127 = arith.constant 0 : index
    %c0_128 = arith.constant 0 : index
    %c0_129 = arith.constant 0 : index
    %406 = vector.load %arg10[%c0_127, %c0_128, %c0_129] : memref<8x2x32xf32, #tpu.memory_space<vmem>>, vector<8x2x32xf32>
    %407 = vector.shape_cast %406 : vector<8x2x32xf32> to vector<16x32xf32>
    %cst_130 = arith.constant 0.000000e+00 : f32
    %408 = vector.broadcast %cst_130 : f32 to vector<16x32xf32>
    %409 = arith.maximumf %407, %408 : vector<16x32xf32>
    %c0_131 = arith.constant 0 : index
    %c0_132 = arith.constant 0 : index
    %410 = vector.load %arg5[%c0_131, %c0_132] : memref<32x8xf32, #tpu.memory_space<vmem>>, vector<32x8xf32>
    %cst_133 = arith.constant dense<0.000000e+00> : vector<16x8xf32>
    %411 = tpu.matmul %409, %410, %cst_133 {dimension_numbers = #tpu.dot_dimension_numbers<[1], [0], [0], [1], [0, 0, 1, 1], [], []>} : vector<16x32xf32>, vector<32x8xf32>, vector<16x8xf32> -> vector<16x8xf32>
    %c0_134 = arith.constant 0 : index
    %c0_135 = arith.constant 0 : index
    %412 = vector.load %arg6[%c0_134, %c0_135] : memref<1x8xf32, #tpu.memory_space<vmem>>, vector<1x8xf32>
    %413 = vector.broadcast %412 : vector<1x8xf32> to vector<16x8xf32>
    %414 = arith.addf %411, %413 : vector<16x8xf32>
    %415 = vector.shape_cast %414 : vector<16x8xf32> to vector<8x2x8xf32>
    %c0_136 = arith.constant 0 : index
    %c0_137 = arith.constant 0 : index
    %c0_138 = arith.constant 0 : index
    %416 = vector.load %arg7[%c0_136, %c0_137, %c0_138] : memref<8x2x8xf32, #tpu.memory_space<vmem>>, vector<8x2x8xf32>
    tpu.vector_store %arg7[%c0_136, %c0_137, %c0_138], %415 {strides = array<i32>} : memref<8x2x8xf32, #tpu.memory_space<vmem>>, vector<8x2x8xf32>,
    return
  }
}

</mosaic_0001>

<llo_original>
// kernel: _lambda_.1
$region0: #{_lambda_.1}
  #allocation0 [shape = 'u32[]', space=smem, size = 0x4, offset = 0x4, fixed_abs, tag = 'smem constant byte address 0x4 - core index']
  #allocation1 [shape = 'u32[72,128]{1,0:T(1,128)}', space=vmem, size = 0x9000, scoped, tag = 'internal scratch']
  #allocation2 [shape = 'f32[8,2,32]{2,1,0:T(2,128)}', space=vmem, size = 0x2000, scoped, tag = 'scratch operand']
  %s0 = inlined_call_operand.vmem [shape: f32[8,2,32], index: 0, kind: input, shape index: {}]
  %s1 = inlined_call_operand.vmem [shape: f32[2,2,32], index: 1, kind: input, shape index: {}]
  %s2 = inlined_call_operand.vmem [shape: f32[2,2,32], index: 2, kind: input, shape index: {}]
  %s3 = inlined_call_operand.hbm [shape: f32[2,64,128], index: 3, kind: input, shape index: {}]
  %s4 = inlined_call_operand.vmem [shape: f32[2,1,128], index: 4, kind: input, shape index: {}]
  %s5 = inlined_call_operand.vmem [shape: f32[32,8], index: 5, kind: input, shape index: {}]
  %s6 = inlined_call_operand.vmem [shape: f32[1,8], index: 6, kind: input, shape index: {}]
  %s7 = inlined_call_operand.vmem [shape: f32[8,2,8], index: 7, kind: output, shape index: {0}]
  %s8 = inlined_call_operand.hbm [shape: f32[2,2,32], index: 8, kind: output, shape index: {1}]
  %s9 = inlined_call_operand.hbm [shape: f32[2,2,32], index: 9, kind: output, shape index: {2}]
  %10 = xla_tuple %s7, %s8, %s9
  %s11 = sld [smem:[#allocation0]]
  $region58: #{_lambda_.1} parent=0
    _
  %s13 = ssub.s32 1, %s11
  %s14 = scalar_select 0, %s13, %s11
  $region1: #{_lambda_.1} parent=0
    #allocation3 [shape = 'u8[65536]{0}', space=vmem, size = 0x10000, scoped, tag = 'input window, operand 3, single buffered']
    #allocation4 [shape = 's32[1]{0}', space=sflag, size = 0x4, scoped, tag = 'scoped memory for _lambda_.1']
    #allocation5 [shape = 's32[1]{0}', space=sflag, size = 0x4, scoped, tag = 'scoped memory for _lambda_.1']
    #allocation6 [shape = 'u8[2048]{0}', space=vmem, size = 0x800, scoped, tag = 'output window, operand 1, single buffered']
    #allocation7 [shape = 'u8[2048]{0}', space=vmem, size = 0x800, scoped, tag = 'output window, operand 2, single buffered']
    #allocation8 [shape = 's32[1]{0}', space=sflag, size = 0x4, scoped, tag = 'scoped memory for _lambda_.1']
    %15 = vsyncpa [#allocation4], 0
    %16 = vsyncpa [#allocation5], 0
    %17 = vsyncpa [#allocation8], 0
    // Predicated region
    $region2: #{_lambda_.1} parent=1 // pred_check
      _
    $region3: #{_lambda_.1} parent=1 // pred_check_branch
      %19 = sbr.rel (0) target = $region5
    $region4: #{_lambda_.1} parent=1 // pred_region
      _
    $region5: #{_lambda_.1} parent=1 // pred_fallthru
      _
    // Predicated region
    $region6: #{_lambda_.1} parent=1 // pred_check
      _
    $region7: #{_lambda_.1} parent=1 // pred_check_branch
      %21 = sbr.rel (0) target = $region9
    $region8: #{_lambda_.1} parent=1 // pred_region
      _
    $region9: #{_lambda_.1} parent=1 // pred_fallthru
      _
    // Predicated region
    $region10: #{_lambda_.1} parent=1 // pred_check
      _
    $region11: #{_lambda_.1} parent=1 // pred_check_branch
      %23 = sbr.rel (0) target = $region13
    $region12: #{_lambda_.1} parent=1 // pred_region
      _
    $region13: #{_lambda_.1} parent=1 // pred_fallthru
      _
    // Predicated region
    $region14: #{_lambda_.1} parent=1 // pred_check
      _
    $region15: #{_lambda_.1} parent=1 // pred_check_branch
      %25 = sbr.rel (0) target = $region17
    $region16: #{_lambda_.1} parent=1 // pred_region
      %27 = vsyncadd [#allocation4], 0
      %s28 = sshll.u32 %s3, 4
      %s29 = int_to_ptr.hbm [resolvable:$true] %s28
      %s30 = sshll.u32 [#allocation3], 4
      %s31 = int_to_ptr.vmem [resolvable:$true] %s30
      %36 = dma.hbm_to_vmem [thread:$0]  %s29, 2048, %s31, [#allocation4], 128, 128, 8
    $region17: #{_lambda_.1} parent=1 // pred_fallthru
      _
    // Predicated region
    $region18: #{_lambda_.1} parent=1 // pred_check
      _
    $region19: #{_lambda_.1} parent=1 // pred_check_branch
      %38 = sbr.rel (0) target = $region21
    $region20: #{_lambda_.1} parent=1 // pred_region
      _
    $region21: #{_lambda_.1} parent=1 // pred_fallthru
      _
    // Predicated region
    $region22: #{_lambda_.1} parent=1 // pred_check
      _
    $region23: #{_lambda_.1} parent=1 // pred_check_branch
      %40 = sbr.rel (0) target = $region25
    $region24: #{_lambda_.1} parent=1 // pred_region
      _
    $region25: #{_lambda_.1} parent=1 // pred_fallthru
      _
    // Predicated region
    $region26: #{_lambda_.1} parent=1 // pred_check
      _
    $region27: #{_lambda_.1} parent=1 // pred_check_branch
      %42 = sbr.rel (0) target = $region29
    $region28: #{_lambda_.1} parent=1 // pred_region
      _
    $region29: #{_lambda_.1} parent=1 // pred_fallthru
      _
    // Predicated region
    $region30: #{_lambda_.1} parent=1 // pred_check
      _
    $region31: #{_lambda_.1} parent=1 // pred_check_branch
      %44 = sbr.rel (0) target = $region33
    $region32: #{_lambda_.1} parent=1 // pred_region
      %46 = dma.done [#allocation4], 2048
    $region33: #{_lambda_.1} parent=1 // pred_fallthru
      _
    %v47 = vld [vmem:[#allocation3] sm:$0xff]
    %v48 = vld [vmem:[#allocation3 + $0x8] sm:$0xff]
    %v49 = vld [vmem:[#allocation3 + $0x10] sm:$0xff]
    %v50 = vld [vmem:[#allocation3 + $0x18] sm:$0xff]
    %v51 = vld [vmem:[#allocation3 + $0x20] sm:$0xff]
    %v52 = vld [vmem:[#allocation3 + $0x28] sm:$0xff]
    %v53 = vld [vmem:[#allocation3 + $0x30] sm:$0xff]
    %v54 = vld [vmem:[#allocation3 + $0x38] sm:$0xff]
    %v55 = vld [vmem:[%s4] sm:$0x1]
    %s56 = scalar_lea.vmem [#allocation3], 64
    %v57 = vld [vmem:[%s56] sm:$0xff]
    %v58 = vld [vmem:[%s56 + $0x8] sm:$0xff]
    %v59 = vld [vmem:[%s56 + $0x10] sm:$0xff]
    %v60 = vld [vmem:[%s56 + $0x18] sm:$0xff]
    %v61 = vld [vmem:[%s56 + $0x20] sm:$0xff]
    %v62 = vld [vmem:[%s56 + $0x28] sm:$0xff]
    %v63 = vld [vmem:[%s56 + $0x30] sm:$0xff]
    %v64 = vld [vmem:[%s56 + $0x38] sm:$0xff]
    %s65 = scalar_lea.vmem %s4, 1
    %v66 = vld [vmem:[%s65] sm:$0x1]
    %v67 = vld [vmem:[%s0] sm:$0x3]
    %v68 = vld [vmem:[%s0 + $0x2] sm:$0x3]
    %v69 = vld [vmem:[%s0 + $0x4] sm:$0x3]
    %v70 = vld [vmem:[%s0 + $0x6] sm:$0x3]
    %v71 = vld [vmem:[%s0 + $0x8] sm:$0x3]
    %v72 = vld [vmem:[%s0 + $0xa] sm:$0x3]
    %v73 = vld [vmem:[%s0 + $0xc] sm:$0x3]
    %v74 = vld [vmem:[%s0 + $0xe] sm:$0x3]
    %v76 = vperm.slane %v55, 0
    %86 = vst [vmem:[#allocation1] ss:$4 sm:$0xff] %v67
    %s87 = scalar_lea.vmem [#allocation1], 1
    %88 = vst [vmem:[%s87] ss:$4 sm:$0xff] %v68
    %s89 = scalar_lea.vmem [#allocation1], 2
    %90 = vst [vmem:[%s89] ss:$4 sm:$0xff] %v69
    %s91 = scalar_lea.vmem [#allocation1], 3
    %92 = vst [vmem:[%s91] ss:$4 sm:$0xff] %v70
    %s93 = scalar_lea.vmem [#allocation1], 32
    %94 = vst [vmem:[%s93] ss:$4 sm:$0xff] %v71
    %s95 = scalar_lea.vmem [#allocation1], 33
    %96 = vst [vmem:[%s95] ss:$4 sm:$0xff] %v72
    %s97 = scalar_lea.vmem [#allocation1], 34
    %98 = vst [vmem:[%s97] ss:$4 sm:$0xff] %v73
    %s99 = scalar_lea.vmem [#allocation1], 35
    %100 = vst [vmem:[%s99] ss:$4 sm:$0xff] %v74
    %v101 = vld.sshfl [vmem:[#allocation1] sm:$0xff pattern:$0x73625140]
    %v102 = vld.sshfl [vmem:[#allocation1 + $0x20] sm:$0xff pattern:$0x73625140]
    %vm103 = vcmask 261120
    %v104 = vsel %vm103, %v101, 0
    %v106 = vsel %vm103, %v102, 0
    %108 = vmatpush.msra.mxu0 0.0
    %109 = vmatpush.msra.mxu0 0.0
    %110 = vmatpush.msra.mxu0 0.0
    %111 = vmatpush.msra.mxu0 0.0
    %112 = vmatpush.msra.mxu0 0.0
    %113 = vmatpush.msra.mxu0 0.0
    %114 = vmatpush.msra.mxu0 0.0
    %115 = vmatpush.msra.mxu0 0.0
    %116 = vmatpush.msra.mxu0 0.0
    %117 = vmatpush.msra.mxu0 0.0
    %118 = vmatpush.msra.mxu0 0.0
    %119 = vmatpush.msra.mxu0 0.0
    %120 = vmatpush.msra.mxu0 %v50
    %121 = vmatpush.msra.mxu0 %v49
    %122 = vmatpush.msra.mxu0 %v48
    %123 = vmatpush.msra.mxu0 %v47
    %124 = vmatmul.f32.gmra.mxu0 %v104
    %v125 = vpop.f32.mrf.mxu0
    %v126 = vadd.f32 %v76, %v125
    %127 = vmatmul.f32.gmra.mxu0 %v106
    %v128 = vpop.f32.mrf.mxu0
    %v129 = vadd.f32 %v76, %v128
    %130 = vdwg.mxu0
    %v133 = vrot.slane %v126, 2
    %v134 = vrot.slane %v126, 4
    %v135 = vrot.slane %v126, 6
    %v136 = vrot.slane %v129, 2
    %v137 = vrot.slane %v129, 4
    %v138 = vrot.slane %v129, 6
    %v145 = vld [vmem:[%s1] sm:$0x3]
    %s146 = scalar_lea.vmem %s1, 2
    %v147 = vld [vmem:[%s146] sm:$0x3]
    %v148 = vld [vmem:[%s2] sm:$0x3]
    %s149 = scalar_lea.vmem %s2, 2
    %v150 = vld [vmem:[%s149] sm:$0x3]
    %v152 = vsel %vm103, %v145, 0
    %154 = vmatpush.msra.mxu0 0.0
    %155 = vmatpush.msra.mxu0 0.0
    %156 = vmatpush.msra.mxu0 0.0
    %157 = vmatpush.msra.mxu0 0.0
    %158 = vmatpush.msra.mxu0 0.0
    %159 = vmatpush.msra.mxu0 0.0
    %160 = vmatpush.msra.mxu0 0.0
    %161 = vmatpush.msra.mxu0 0.0
    %162 = vmatpush.msra.mxu0 0.0
    %163 = vmatpush.msra.mxu0 0.0
    %164 = vmatpush.msra.mxu0 0.0
    %165 = vmatpush.msra.mxu0 0.0
    %166 = vmatpush.msra.mxu0 %v54
    %167 = vmatpush.msra.mxu0 %v53
    %168 = vmatpush.msra.mxu0 %v52
    %169 = vmatpush.msra.mxu0 %v51
    %170 = vmatmul.f32.gmra.mxu0 %v152
    %v171 = vpop.f32.mrf.mxu0
    %v172 = vadd.f32 0.0, %v171
    %173 = vdwg.mxu0
    %v174 = vadd.f32 %v126, %v172
    %v175 = vmul.f32 %v174, 0.5
    %v176 = vtanh.pop %v175
    %v177 = vadd.f32 %v176, 1.0
    %v178 = vmul.f32 %v177, 0.5
    %v179 = vtanh.pop %v174
    %181 = vrot.lane.b32.xlu0 %v148, 32
    %v182 = vpop.permute.xlu0 %181
    %v184 = vmul.f32 %v178, %v182
    %186 = vrot.lane.b32.xlu0 %v179, 64
    %v187 = vpop.permute.xlu0 %186
    %v189 = vmul.f32 %v178, %v187
    %191 = vrot.lane.b32.xlu0 %v189, 32
    %v192 = vpop.permute.xlu0 %191
    %v194 = vadd.f32 %v184, %v192
    %v195 = vtanh.pop %v194
    %197 = vrot.lane.b32.xlu0 %v195, 64
    %v198 = vpop.permute.xlu0 %197
    %v200 = vmul.f32 %v178, %v198
    %v202 = vperm.slane %v66, 0
    %205 = vst [vmem:[#allocation1] ss:$4 sm:$0xff] %v200
    %v206 = vld.sshfl [vmem:[#allocation1] sm:$0xff pattern:$0x73625140]
    %207 = vrot.lane.b32.xlu0 %v206, 32
    %v208 = vpop.permute.xlu0 %207
    %v209 = vsel %vm103, %v208, 0
    %211 = vmatpush.msra.mxu0 0.0
    %212 = vmatpush.msra.mxu0 0.0
    %213 = vmatpush.msra.mxu0 0.0
    %214 = vmatpush.msra.mxu0 0.0
    %215 = vmatpush.msra.mxu0 0.0
    %216 = vmatpush.msra.mxu0 0.0
    %217 = vmatpush.msra.mxu0 0.0
    %218 = vmatpush.msra.mxu0 0.0
    %219 = vmatpush.msra.mxu0 0.0
    %220 = vmatpush.msra.mxu0 0.0
    %221 = vmatpush.msra.mxu0 0.0
    %222 = vmatpush.msra.mxu0 0.0
    %223 = vmatpush.msra.mxu0 %v60
    %224 = vmatpush.msra.mxu0 %v59
    %225 = vmatpush.msra.mxu0 %v58
    %226 = vmatpush.msra.mxu0 %v57
    %227 = vmatmul.f32.gmra.mxu0 %v209
    %v228 = vpop.f32.mrf.mxu0
    %v229 = vadd.f32 %v202, %v228
    %230 = vdwg.mxu0
    %v232 = vsel %vm103, %v147, 0
    %234 = vmatpush.msra.mxu0 0.0
    %235 = vmatpush.msra.mxu0 0.0
    %236 = vmatpush.msra.mxu0 0.0
    %237 = vmatpush.msra.mxu0 0.0
    %238 = vmatpush.msra.mxu0 0.0
    %239 = vmatpush.msra.mxu0 0.0
    %240 = vmatpush.msra.mxu0 0.0
    %241 = vmatpush.msra.mxu0 0.0
    %242 = vmatpush.msra.mxu0 0.0
    %243 = vmatpush.msra.mxu0 0.0
    %244 = vmatpush.msra.mxu0 0.0
    %245 = vmatpush.msra.mxu0 0.0
    %246 = vmatpush.msra.mxu0 %v64
    %247 = vmatpush.msra.mxu0 %v63
    %248 = vmatpush.msra.mxu0 %v62
    %249 = vmatpush.msra.mxu0 %v61
    %250 = vmatmul.f32.gmra.mxu0 %v232
    %v251 = vpop.f32.mrf.mxu0
    %v252 = vadd.f32 0.0, %v251
    %253 = vdwg.mxu0
    %v254 = vadd.f32 %v229, %v252
    %v255 = vmul.f32 %v254, 0.5
    %v256 = vtanh.pop %v255
    %v257 = vadd.f32 %v256, 1.0
    %v258 = vmul.f32 %v257, 0.5
    %v259 = vtanh.pop %v254
    %261 = vrot.lane.b32.xlu0 %v150, 32
    %v262 = vpop.permute.xlu0 %261
    %v264 = vmul.f32 %v258, %v262
    %266 = vrot.lane.b32.xlu0 %v259, 64
    %v267 = vpop.permute.xlu0 %266
    %v269 = vmul.f32 %v258, %v267
    %271 = vrot.lane.b32.xlu0 %v269, 32
    %v272 = vpop.permute.xlu0 %271
    %v274 = vadd.f32 %v264, %v272
    %v275 = vtanh.pop %v274
    %277 = vrot.lane.b32.xlu0 %v275, 64
    %v278 = vpop.permute.xlu0 %277
    %v280 = vmul.f32 %v258, %v278
    %282 = vrot.lane.b32.xlu0 %v280, 32
    %v283 = vpop.permute.xlu0 %282
    %vm285 = vcmask 254976
    %286 = vst.msk [vmem:[#allocation2] sm:$0x3] %vm285, %v283
    %287 = vst [vmem:[#allocation1] ss:$4 sm:$0xff] %v200
    %v288 = vld.sshfl [vmem:[#allocation1] sm:$0xff pattern:$0x73625140]
    %289 = vrot.lane.b32.xlu0 %v288, 32
    %v290 = vpop.permute.xlu0 %289
    %v291 = vsel %vm103, %v290, 0
    %293 = vmatpush.msra.mxu0 0.0
    %294 = vmatpush.msra.mxu0 0.0
    %295 = vmatpush.msra.mxu0 0.0
    %296 = vmatpush.msra.mxu0 0.0
    %297 = vmatpush.msra.mxu0 0.0
    %298 = vmatpush.msra.mxu0 0.0
    %299 = vmatpush.msra.mxu0 0.0
    %300 = vmatpush.msra.mxu0 0.0
    %301 = vmatpush.msra.mxu0 0.0
    %302 = vmatpush.msra.mxu0 0.0
    %303 = vmatpush.msra.mxu0 0.0
    %304 = vmatpush.msra.mxu0 0.0
    %305 = vmatpush.msra.mxu0 %v54
    %306 = vmatpush.msra.mxu0 %v53
    %307 = vmatpush.msra.mxu0 %v52
    %308 = vmatpush.msra.mxu0 %v51
    %309 = vmatmul.f32.gmra.mxu0 %v291
    %v310 = vpop.f32.mrf.mxu0
    %v311 = vadd.f32 0.0, %v310
    %312 = vdwg.mxu0
    %v313 = vadd.f32 %v133, %v311
    %v314 = vmul.f32 %v313, 0.5
    %v315 = vtanh.pop %v314
    %v316 = vadd.f32 %v315, 1.0
    %v317 = vmul.f32 %v316, 0.5
    %v318 = vtanh.pop %v313
    %v319 = vmul.f32 %v317, %v194
    %321 = vrot.lane.b32.xlu0 %v318, 64
    %v322 = vpop.permute.xlu0 %321
    %v324 = vmul.f32 %v317, %v322
    %326 = vrot.lane.b32.xlu0 %v324, 32
    %v327 = vpop.permute.xlu0 %326
    %v329 = vadd.f32 %v319, %v327
    %v330 = vtanh.pop %v329
    %332 = vrot.lane.b32.xlu0 %v330, 64
    %v333 = vpop.permute.xlu0 %332
    %v335 = vmul.f32 %v317, %v333
    %337 = vst [vmem:[#allocation1] ss:$4 sm:$0xff] %v335
    %v338 = vld.sshfl [vmem:[#allocation1] sm:$0xff pattern:$0x73625140]
    %339 = vrot.lane.b32.xlu0 %v338, 32
    %v340 = vpop.permute.xlu0 %339
    %v341 = vsel %vm103, %v340, 0
    %343 = vmatpush.msra.mxu0 0.0
    %344 = vmatpush.msra.mxu0 0.0
    %345 = vmatpush.msra.mxu0 0.0
    %346 = vmatpush.msra.mxu0 0.0
    %347 = vmatpush.msra.mxu0 0.0
    %348 = vmatpush.msra.mxu0 0.0
    %349 = vmatpush.msra.mxu0 0.0
    %350 = vmatpush.msra.mxu0 0.0
    %351 = vmatpush.msra.mxu0 0.0
    %352 = vmatpush.msra.mxu0 0.0
    %353 = vmatpush.msra.mxu0 0.0
    %354 = vmatpush.msra.mxu0 0.0
    %355 = vmatpush.msra.mxu0 %v60
    %356 = vmatpush.msra.mxu0 %v59
    %357 = vmatpush.msra.mxu0 %v58
    %358 = vmatpush.msra.mxu0 %v57
    %359 = vmatmul.f32.gmra.mxu0 %v341
    %v360 = vpop.f32.mrf.mxu0
    %v361 = vadd.f32 %v202, %v360
    %362 = vdwg.mxu0
    %v363 = vsel %vm103, %v283, 0
    %365 = vmatpush.msra.mxu0 0.0
    %366 = vmatpush.msra.mxu0 0.0
    %367 = vmatpush.msra.mxu0 0.0
    %368 = vmatpush.msra.mxu0 0.0
    %369 = vmatpush.msra.mxu0 0.0
    %370 = vmatpush.msra.mxu0 0.0
    %371 = vmatpush.msra.mxu0 0.0
    %372 = vmatpush.msra.mxu0 0.0
    %373 = vmatpush.msra.mxu0 0.0
    %374 = vmatpush.msra.mxu0 0.0
    %375 = vmatpush.msra.mxu0 0.0
    %376 = vmatpush.msra.mxu0 0.0
    %377 = vmatpush.msra.mxu0 %v64
    %378 = vmatpush.msra.mxu0 %v63
    %379 = vmatpush.msra.mxu0 %v62
    %380 = vmatpush.msra.mxu0 %v61
    %381 = vmatmul.f32.gmra.mxu0 %v363
    %v382 = vpop.f32.mrf.mxu0
    %v383 = vadd.f32 0.0, %v382
    %384 = vdwg.mxu0
    %v385 = vadd.f32 %v361, %v383
    %v386 = vmul.f32 %v385, 0.5
    %v387 = vtanh.pop %v386
    %v388 = vadd.f32 %v387, 1.0
    %v389 = vmul.f32 %v388, 0.5
    %v390 = vtanh.pop %v385
    %v391 = vmul.f32 %v389, %v274
    %393 = vrot.lane.b32.xlu0 %v390, 64
    %v394 = vpop.permute.xlu0 %393
    %v396 = vmul.f32 %v389, %v394
    %398 = vrot.lane.b32.xlu0 %v396, 32
    %v399 = vpop.permute.xlu0 %398
    %v401 = vadd.f32 %v391, %v399
    %v402 = vtanh.pop %v401
    %404 = vrot.lane.b32.xlu0 %v402, 64
    %v405 = vpop.permute.xlu0 %404
    %v407 = vmul.f32 %v389, %v405
    %409 = vrot.lane.b32.xlu0 %v407, 32
    %v410 = vpop.permute.xlu0 %409
    %s412 = scalar_lea.vmem [#allocation2], 2
    %413 = vst.msk [vmem:[%s412] sm:$0x3] %vm285, %v410
    %414 = vst [vmem:[#allocation1] ss:$4 sm:$0xff] %v335
    %v415 = vld.sshfl [vmem:[#allocation1] sm:$0xff pattern:$0x73625140]
    %416 = vrot.lane.b32.xlu0 %v415, 32
    %v417 = vpop.permute.xlu0 %416
    %v418 = vsel %vm103, %v417, 0
    %420 = vmatpush.msra.mxu0 0.0
    %421 = vmatpush.msra.mxu0 0.0
    %422 = vmatpush.msra.mxu0 0.0
    %423 = vmatpush.msra.mxu0 0.0
    %424 = vmatpush.msra.mxu0 0.0
    %425 = vmatpush.msra.mxu0 0.0
    %426 = vmatpush.msra.mxu0 0.0
    %427 = vmatpush.msra.mxu0 0.0
    %428 = vmatpush.msra.mxu0 0.0
    %429 = vmatpush.msra.mxu0 0.0
    %430 = vmatpush.msra.mxu0 0.0
    %431 = vmatpush.msra.mxu0 0.0
    %432 = vmatpush.msra.mxu0 %v54
    %433 = vmatpush.msra.mxu0 %v53
    %434 = vmatpush.msra.mxu0 %v52
    %435 = vmatpush.msra.mxu0 %v51
    %436 = vmatmul.f32.gmra.mxu0 %v418
    %v437 = vpop.f32.mrf.mxu0
    %v438 = vadd.f32 0.0, %v437
    %439 = vdwg.mxu0
    %v440 = vadd.f32 %v134, %v438
    %v441 = vmul.f32 %v440, 0.5
    %v442 = vtanh.pop %v441
    %v443 = vadd.f32 %v442, 1.0
    %v444 = vmul.f32 %v443, 0.5
    %v445 = vtanh.pop %v440
    %v446 = vmul.f32 %v444, %v329
    %448 = vrot.lane.b32.xlu0 %v445, 64
    %v449 = vpop.permute.xlu0 %448
    %v451 = vmul.f32 %v444, %v449
    %453 = vrot.lane.b32.xlu0 %v451, 32
    %v454 = vpop.permute.xlu0 %453
    %v456 = vadd.f32 %v446, %v454
    %v457 = vtanh.pop %v456
    %459 = vrot.lane.b32.xlu0 %v457, 64
    %v460 = vpop.permute.xlu0 %459
    %v462 = vmul.f32 %v444, %v460
    %464 = vst [vmem:[#allocation1] ss:$4 sm:$0xff] %v462
    %v465 = vld.sshfl [vmem:[#allocation1] sm:$0xff pattern:$0x73625140]
    %466 = vrot.lane.b32.xlu0 %v465, 32
    %v467 = vpop.permute.xlu0 %466
    %v468 = vsel %vm103, %v467, 0
    %470 = vmatpush.msra.mxu0 0.0
    %471 = vmatpush.msra.mxu0 0.0
    %472 = vmatpush.msra.mxu0 0.0
    %473 = vmatpush.msra.mxu0 0.0
    %474 = vmatpush.msra.mxu0 0.0
    %475 = vmatpush.msra.mxu0 0.0
    %476 = vmatpush.msra.mxu0 0.0
    %477 = vmatpush.msra.mxu0 0.0
    %478 = vmatpush.msra.mxu0 0.0
    %479 = vmatpush.msra.mxu0 0.0
    %480 = vmatpush.msra.mxu0 0.0
    %481 = vmatpush.msra.mxu0 0.0
    %482 = vmatpush.msra.mxu0 %v60
    %483 = vmatpush.msra.mxu0 %v59
    %484 = vmatpush.msra.mxu0 %v58
    %485 = vmatpush.msra.mxu0 %v57
    %486 = vmatmul.f32.gmra.mxu0 %v468
    %v487 = vpop.f32.mrf.mxu0
    %v488 = vadd.f32 %v202, %v487
    %489 = vdwg.mxu0
    %v490 = vsel %vm103, %v410, 0
    %492 = vmatpush.msra.mxu0 0.0
    %493 = vmatpush.msra.mxu0 0.0
    %494 = vmatpush.msra.mxu0 0.0
    %495 = vmatpush.msra.mxu0 0.0
    %496 = vmatpush.msra.mxu0 0.0
    %497 = vmatpush.msra.mxu0 0.0
    %498 = vmatpush.msra.mxu0 0.0
    %499 = vmatpush.msra.mxu0 0.0
    %500 = vmatpush.msra.mxu0 0.0
    %501 = vmatpush.msra.mxu0 0.0
    %502 = vmatpush.msra.mxu0 0.0
    %503 = vmatpush.msra.mxu0 0.0
    %504 = vmatpush.msra.mxu0 %v64
    %505 = vmatpush.msra.mxu0 %v63
    %506 = vmatpush.msra.mxu0 %v62
    %507 = vmatpush.msra.mxu0 %v61
    %508 = vmatmul.f32.gmra.mxu0 %v490
    %v509 = vpop.f32.mrf.mxu0
    %v510 = vadd.f32 0.0, %v509
    %511 = vdwg.mxu0
    %v512 = vadd.f32 %v488, %v510
    %v513 = vmul.f32 %v512, 0.5
    %v514 = vtanh.pop %v513
    %v515 = vadd.f32 %v514, 1.0
    %v516 = vmul.f32 %v515, 0.5
    %v517 = vtanh.pop %v512
    %v518 = vmul.f32 %v516, %v401
    %520 = vrot.lane.b32.xlu0 %v517, 64
    %v521 = vpop.permute.xlu0 %520
    %v523 = vmul.f32 %v516, %v521
    %525 = vrot.lane.b32.xlu0 %v523, 32
    %v526 = vpop.permute.xlu0 %525
    %v528 = vadd.f32 %v518, %v526
    %v529 = vtanh.pop %v528
    %531 = vrot.lane.b32.xlu0 %v529, 64
    %v532 = vpop.permute.xlu0 %531
    %v534 = vmul.f32 %v516, %v532
    %536 = vrot.lane.b32.xlu0 %v534, 32
    %v537 = vpop.permute.xlu0 %536
    %s539 = scalar_lea.vmem [#allocation2], 4
    %540 = vst.msk [vmem:[%s539] sm:$0x3] %vm285, %v537
    %541 = vst [vmem:[#allocation1] ss:$4 sm:$0xff] %v462
    %v542 = vld.sshfl [vmem:[#allocation1] sm:$0xff pattern:$0x73625140]
    %543 = vrot.lane.b32.xlu0 %v542, 32
    %v544 = vpop.permute.xlu0 %543
    %v545 = vsel %vm103, %v544, 0
    %547 = vmatpush.msra.mxu0 0.0
    %548 = vmatpush.msra.mxu0 0.0
    %549 = vmatpush.msra.mxu0 0.0
    %550 = vmatpush.msra.mxu0 0.0
    %551 = vmatpush.msra.mxu0 0.0
    %552 = vmatpush.msra.mxu0 0.0
    %553 = vmatpush.msra.mxu0 0.0
    %554 = vmatpush.msra.mxu0 0.0
    %555 = vmatpush.msra.mxu0 0.0
    %556 = vmatpush.msra.mxu0 0.0
    %557 = vmatpush.msra.mxu0 0.0
    %558 = vmatpush.msra.mxu0 0.0
    %559 = vmatpush.msra.mxu0 %v54
    %560 = vmatpush.msra.mxu0 %v53
    %561 = vmatpush.msra.mxu0 %v52
    %562 = vmatpush.msra.mxu0 %v51
    %563 = vmatmul.f32.gmra.mxu0 %v545
    %v564 = vpop.f32.mrf.mxu0
    %v565 = vadd.f32 0.0, %v564
    %566 = vdwg.mxu0
    %v567 = vadd.f32 %v135, %v565
    %v568 = vmul.f32 %v567, 0.5
    %v569 = vtanh.pop %v568
    %v570 = vadd.f32 %v569, 1.0
    %v571 = vmul.f32 %v570, 0.5
    %v572 = vtanh.pop %v567
    %v573 = vmul.f32 %v571, %v456
    %575 = vrot.lane.b32.xlu0 %v572, 64
    %v576 = vpop.permute.xlu0 %575
    %v578 = vmul.f32 %v571, %v576
    %580 = vrot.lane.b32.xlu0 %v578, 32
    %v581 = vpop.permute.xlu0 %580
    %v583 = vadd.f32 %v573, %v581
    %v584 = vtanh.pop %v583
    %586 = vrot.lane.b32.xlu0 %v584, 64
    %v587 = vpop.permute.xlu0 %586
    %v589 = vmul.f32 %v571, %v587
    %591 = vst [vmem:[#allocation1] ss:$4 sm:$0xff] %v589
    %v592 = vld.sshfl [vmem:[#allocation1] sm:$0xff pattern:$0x73625140]
    %593 = vrot.lane.b32.xlu0 %v592, 32
    %v594 = vpop.permute.xlu0 %593
    %v595 = vsel %vm103, %v594, 0
    %597 = vmatpush.msra.mxu0 0.0
    %598 = vmatpush.msra.mxu0 0.0
    %599 = vmatpush.msra.mxu0 0.0
    %600 = vmatpush.msra.mxu0 0.0
    %601 = vmatpush.msra.mxu0 0.0
    %602 = vmatpush.msra.mxu0 0.0
    %603 = vmatpush.msra.mxu0 0.0
    %604 = vmatpush.msra.mxu0 0.0
    %605 = vmatpush.msra.mxu0 0.0
    %606 = vmatpush.msra.mxu0 0.0
    %607 = vmatpush.msra.mxu0 0.0
    %608 = vmatpush.msra.mxu0 0.0
    %609 = vmatpush.msra.mxu0 %v60
    %610 = vmatpush.msra.mxu0 %v59
    %611 = vmatpush.msra.mxu0 %v58
    %612 = vmatpush.msra.mxu0 %v57
    %613 = vmatmul.f32.gmra.mxu0 %v595
    %v614 = vpop.f32.mrf.mxu0
    %v615 = vadd.f32 %v202, %v614
    %616 = vdwg.mxu0
    %v617 = vsel %vm103, %v537, 0
    %619 = vmatpush.msra.mxu0 0.0
    %620 = vmatpush.msra.mxu0 0.0
    %621 = vmatpush.msra.mxu0 0.0
    %622 = vmatpush.msra.mxu0 0.0
    %623 = vmatpush.msra.mxu0 0.0
    %624 = vmatpush.msra.mxu0 0.0
    %625 = vmatpush.msra.mxu0 0.0
    %626 = vmatpush.msra.mxu0 0.0
    %627 = vmatpush.msra.mxu0 0.0
    %628 = vmatpush.msra.mxu0 0.0
    %629 = vmatpush.msra.mxu0 0.0
    %630 = vmatpush.msra.mxu0 0.0
    %631 = vmatpush.msra.mxu0 %v64
    %632 = vmatpush.msra.mxu0 %v63
    %633 = vmatpush.msra.mxu0 %v62
    %634 = vmatpush.msra.mxu0 %v61
    %635 = vmatmul.f32.gmra.mxu0 %v617
    %v636 = vpop.f32.mrf.mxu0
    %v637 = vadd.f32 0.0, %v636
    %638 = vdwg.mxu0
    %v639 = vadd.f32 %v615, %v637
    %v640 = vmul.f32 %v639, 0.5
    %v641 = vtanh.pop %v640
    %v642 = vadd.f32 %v641, 1.0
    %v643 = vmul.f32 %v642, 0.5
    %v644 = vtanh.pop %v639
    %v645 = vmul.f32 %v643, %v528
    %647 = vrot.lane.b32.xlu0 %v644, 64
    %v648 = vpop.permute.xlu0 %647
    %v650 = vmul.f32 %v643, %v648
    %652 = vrot.lane.b32.xlu0 %v650, 32
    %v653 = vpop.permute.xlu0 %652
    %v655 = vadd.f32 %v645, %v653
    %v656 = vtanh.pop %v655
    %658 = vrot.lane.b32.xlu0 %v656, 64
    %v659 = vpop.permute.xlu0 %658
    %v661 = vmul.f32 %v643, %v659
    %663 = vrot.lane.b32.xlu0 %v661, 32
    %v664 = vpop.permute.xlu0 %663
    %s666 = scalar_lea.vmem [#allocation2], 6
    %667 = vst.msk [vmem:[%s666] sm:$0x3] %vm285, %v664
    %668 = vst [vmem:[#allocation1] ss:$4 sm:$0xff] %v589
    %v669 = vld.sshfl [vmem:[#allocation1] sm:$0xff pattern:$0x73625140]
    %670 = vrot.lane.b32.xlu0 %v669, 32
    %v671 = vpop.permute.xlu0 %670
    %v672 = vsel %vm103, %v671, 0
    %674 = vmatpush.msra.mxu0 0.0
    %675 = vmatpush.msra.mxu0 0.0
    %676 = vmatpush.msra.mxu0 0.0
    %677 = vmatpush.msra.mxu0 0.0
    %678 = vmatpush.msra.mxu0 0.0
    %679 = vmatpush.msra.mxu0 0.0
    %680 = vmatpush.msra.mxu0 0.0
    %681 = vmatpush.msra.mxu0 0.0
    %682 = vmatpush.msra.mxu0 0.0
    %683 = vmatpush.msra.mxu0 0.0
    %684 = vmatpush.msra.mxu0 0.0
    %685 = vmatpush.msra.mxu0 0.0
    %686 = vmatpush.msra.mxu0 %v54
    %687 = vmatpush.msra.mxu0 %v53
    %688 = vmatpush.msra.mxu0 %v52
    %689 = vmatpush.msra.mxu0 %v51
    %690 = vmatmul.f32.gmra.mxu0 %v672
    %v691 = vpop.f32.mrf.mxu0
    %v692 = vadd.f32 0.0, %v691
    %693 = vdwg.mxu0
    %v694 = vadd.f32 %v129, %v692
    %v695 = vmul.f32 %v694, 0.5
    %v696 = vtanh.pop %v695
    %v697 = vadd.f32 %v696, 1.0
    %v698 = vmul.f32 %v697, 0.5
    %v699 = vtanh.pop %v694
    %v700 = vmul.f32 %v698, %v583
    %702 = vrot.lane.b32.xlu0 %v699, 64
    %v703 = vpop.permute.xlu0 %702
    %v705 = vmul.f32 %v698, %v703
    %707 = vrot.lane.b32.xlu0 %v705, 32
    %v708 = vpop.permute.xlu0 %707
    %v710 = vadd.f32 %v700, %v708
    %v711 = vtanh.pop %v710
    %713 = vrot.lane.b32.xlu0 %v711, 64
    %v714 = vpop.permute.xlu0 %713
    %v716 = vmul.f32 %v698, %v714
    %718 = vst [vmem:[#allocation1] ss:$4 sm:$0xff] %v716
    %v719 = vld.sshfl [vmem:[#allocation1] sm:$0xff pattern:$0x73625140]
    %720 = vrot.lane.b32.xlu0 %v719, 32
    %v721 = vpop.permute.xlu0 %720
    %v722 = vsel %vm103, %v721, 0
    %724 = vmatpush.msra.mxu0 0.0
    %725 = vmatpush.msra.mxu0 0.0
    %726 = vmatpush.msra.mxu0 0.0
    %727 = vmatpush.msra.mxu0 0.0
    %728 = vmatpush.msra.mxu0 0.0
    %729 = vmatpush.msra.mxu0 0.0
    %730 = vmatpush.msra.mxu0 0.0
    %731 = vmatpush.msra.mxu0 0.0
    %732 = vmatpush.msra.mxu0 0.0
    %733 = vmatpush.msra.mxu0 0.0
    %734 = vmatpush.msra.mxu0 0.0
    %735 = vmatpush.msra.mxu0 0.0
    %736 = vmatpush.msra.mxu0 %v60
    %737 = vmatpush.msra.mxu0 %v59
    %738 = vmatpush.msra.mxu0 %v58
    %739 = vmatpush.msra.mxu0 %v57
    %740 = vmatmul.f32.gmra.mxu0 %v722
    %v741 = vpop.f32.mrf.mxu0
    %v742 = vadd.f32 %v202, %v741
    %743 = vdwg.mxu0
    %v744 = vsel %vm103, %v664, 0
    %746 = vmatpush.msra.mxu0 0.0
    %747 = vmatpush.msra.mxu0 0.0
    %748 = vmatpush.msra.mxu0 0.0
    %749 = vmatpush.msra.mxu0 0.0
    %750 = vmatpush.msra.mxu0 0.0
    %751 = vmatpush.msra.mxu0 0.0
    %752 = vmatpush.msra.mxu0 0.0
    %753 = vmatpush.msra.mxu0 0.0
    %754 = vmatpush.msra.mxu0 0.0
    %755 = vmatpush.msra.mxu0 0.0
    %756 = vmatpush.msra.mxu0 0.0
    %757 = vmatpush.msra.mxu0 0.0
    %758 = vmatpush.msra.mxu0 %v64
    %759 = vmatpush.msra.mxu0 %v63
    %760 = vmatpush.msra.mxu0 %v62
    %761 = vmatpush.msra.mxu0 %v61
    %762 = vmatmul.f32.gmra.mxu0 %v744
    %v763 = vpop.f32.mrf.mxu0
    %v764 = vadd.f32 0.0, %v763
    %765 = vdwg.mxu0
    %v766 = vadd.f32 %v742, %v764
    %v767 = vmul.f32 %v766, 0.5
    %v768 = vtanh.pop %v767
    %v769 = vadd.f32 %v768, 1.0
    %v770 = vmul.f32 %v769, 0.5
    %v771 = vtanh.pop %v766
    %v772 = vmul.f32 %v770, %v655
    %774 = vrot.lane.b32.xlu0 %v771, 64
    %v775 = vpop.permute.xlu0 %774
    %v777 = vmul.f32 %v770, %v775
    %779 = vrot.lane.b32.xlu0 %v777, 32
    %v780 = vpop.permute.xlu0 %779
    %v782 = vadd.f32 %v772, %v780
    %v783 = vtanh.pop %v782
    %785 = vrot.lane.b32.xlu0 %v783, 64
    %v786 = vpop.permute.xlu0 %785
    %v788 = vmul.f32 %v770, %v786
    %790 = vrot.lane.b32.xlu0 %v788, 32
    %v791 = vpop.permute.xlu0 %790
    %s793 = scalar_lea.vmem [#allocation2], 8
    %794 = vst.msk [vmem:[%s793] sm:$0x3] %vm285, %v791
    %795 = vst [vmem:[#allocation1] ss:$4 sm:$0xff] %v716
    %v796 = vld.sshfl [vmem:[#allocation1] sm:$0xff pattern:$0x73625140]
    %797 = vrot.lane.b32.xlu0 %v796, 32
    %v798 = vpop.permute.xlu0 %797
    %v799 = vsel %vm103, %v798, 0
    %801 = vmatpush.msra.mxu0 0.0
    %802 = vmatpush.msra.mxu0 0.0
    %803 = vmatpush.msra.mxu0 0.0
    %804 = vmatpush.msra.mxu0 0.0
    %805 = vmatpush.msra.mxu0 0.0
    %806 = vmatpush.msra.mxu0 0.0
    %807 = vmatpush.msra.mxu0 0.0
    %808 = vmatpush.msra.mxu0 0.0
    %809 = vmatpush.msra.mxu0 0.0
    %810 = vmatpush.msra.mxu0 0.0
    %811 = vmatpush.msra.mxu0 0.0
    %812 = vmatpush.msra.mxu0 0.0
    %813 = vmatpush.msra.mxu0 %v54
    %814 = vmatpush.msra.mxu0 %v53
    %815 = vmatpush.msra.mxu0 %v52
    %816 = vmatpush.msra.mxu0 %v51
    %817 = vmatmul.f32.gmra.mxu0 %v799
    %v818 = vpop.f32.mrf.mxu0
    %v819 = vadd.f32 0.0, %v818
    %820 = vdwg.mxu0
    %v821 = vadd.f32 %v136, %v819
    %v822 = vmul.f32 %v821, 0.5
    %v823 = vtanh.pop %v822
    %v824 = vadd.f32 %v823, 1.0
    %v825 = vmul.f32 %v824, 0.5
    %v826 = vtanh.pop %v821
    %v827 = vmul.f32 %v825, %v710
    %829 = vrot.lane.b32.xlu0 %v826, 64
    %v830 = vpop.permute.xlu0 %829
    %v832 = vmul.f32 %v825, %v830
    %834 = vrot.lane.b32.xlu0 %v832, 32
    %v835 = vpop.permute.xlu0 %834
    %v837 = vadd.f32 %v827, %v835
    %v838 = vtanh.pop %v837
    %840 = vrot.lane.b32.xlu0 %v838, 64
    %v841 = vpop.permute.xlu0 %840
    %v843 = vmul.f32 %v825, %v841
    %845 = vst [vmem:[#allocation1] ss:$4 sm:$0xff] %v843
    %v846 = vld.sshfl [vmem:[#allocation1] sm:$0xff pattern:$0x73625140]
    %847 = vrot.lane.b32.xlu0 %v846, 32
    %v848 = vpop.permute.xlu0 %847
    %v849 = vsel %vm103, %v848, 0
    %851 = vmatpush.msra.mxu0 0.0
    %852 = vmatpush.msra.mxu0 0.0
    %853 = vmatpush.msra.mxu0 0.0
    %854 = vmatpush.msra.mxu0 0.0
    %855 = vmatpush.msra.mxu0 0.0
    %856 = vmatpush.msra.mxu0 0.0
    %857 = vmatpush.msra.mxu0 0.0
    %858 = vmatpush.msra.mxu0 0.0
    %859 = vmatpush.msra.mxu0 0.0
    %860 = vmatpush.msra.mxu0 0.0
    %861 = vmatpush.msra.mxu0 0.0
    %862 = vmatpush.msra.mxu0 0.0
    %863 = vmatpush.msra.mxu0 %v60
    %864 = vmatpush.msra.mxu0 %v59
    %865 = vmatpush.msra.mxu0 %v58
    %866 = vmatpush.msra.mxu0 %v57
    %867 = vmatmul.f32.gmra.mxu0 %v849
    %v868 = vpop.f32.mrf.mxu0
    %v869 = vadd.f32 %v202, %v868
    %870 = vdwg.mxu0
    %v871 = vsel %vm103, %v791, 0
    %873 = vmatpush.msra.mxu0 0.0
    %874 = vmatpush.msra.mxu0 0.0
    %875 = vmatpush.msra.mxu0 0.0
    %876 = vmatpush.msra.mxu0 0.0
    %877 = vmatpush.msra.mxu0 0.0
    %878 = vmatpush.msra.mxu0 0.0
    %879 = vmatpush.msra.mxu0 0.0
    %880 = vmatpush.msra.mxu0 0.0
    %881 = vmatpush.msra.mxu0 0.0
    %882 = vmatpush.msra.mxu0 0.0
    %883 = vmatpush.msra.mxu0 0.0
    %884 = vmatpush.msra.mxu0 0.0
    %885 = vmatpush.msra.mxu0 %v64
    %886 = vmatpush.msra.mxu0 %v63
    %887 = vmatpush.msra.mxu0 %v62
    %888 = vmatpush.msra.mxu0 %v61
    %889 = vmatmul.f32.gmra.mxu0 %v871
    %v890 = vpop.f32.mrf.mxu0
    %v891 = vadd.f32 0.0, %v890
    %892 = vdwg.mxu0
    %v893 = vadd.f32 %v869, %v891
    %v894 = vmul.f32 %v893, 0.5
    %v895 = vtanh.pop %v894
    %v896 = vadd.f32 %v895, 1.0
    %v897 = vmul.f32 %v896, 0.5
    %v898 = vtanh.pop %v893
    %v899 = vmul.f32 %v897, %v782
    %901 = vrot.lane.b32.xlu0 %v898, 64
    %v902 = vpop.permute.xlu0 %901
    %v904 = vmul.f32 %v897, %v902
    %906 = vrot.lane.b32.xlu0 %v904, 32
    %v907 = vpop.permute.xlu0 %906
    %v909 = vadd.f32 %v899, %v907
    %v910 = vtanh.pop %v909
    %912 = vrot.lane.b32.xlu0 %v910, 64
    %v913 = vpop.permute.xlu0 %912
    %v915 = vmul.f32 %v897, %v913
    %917 = vrot.lane.b32.xlu0 %v915, 32
    %v918 = vpop.permute.xlu0 %917
    %s920 = scalar_lea.vmem [#allocation2], 10
    %921 = vst.msk [vmem:[%s920] sm:$0x3] %vm285, %v918
    %922 = vst [vmem:[#allocation1] ss:$4 sm:$0xff] %v843
    %v923 = vld.sshfl [vmem:[#allocation1] sm:$0xff pattern:$0x73625140]
    %924 = vrot.lane.b32.xlu0 %v923, 32
    %v925 = vpop.permute.xlu0 %924
    %v926 = vsel %vm103, %v925, 0
    %928 = vmatpush.msra.mxu0 0.0
    %929 = vmatpush.msra.mxu0 0.0
    %930 = vmatpush.msra.mxu0 0.0
    %931 = vmatpush.msra.mxu0 0.0
    %932 = vmatpush.msra.mxu0 0.0
    %933 = vmatpush.msra.mxu0 0.0
    %934 = vmatpush.msra.mxu0 0.0
    %935 = vmatpush.msra.mxu0 0.0
    %936 = vmatpush.msra.mxu0 0.0
    %937 = vmatpush.msra.mxu0 0.0
    %938 = vmatpush.msra.mxu0 0.0
    %939 = vmatpush.msra.mxu0 0.0
    %940 = vmatpush.msra.mxu0 %v54
    %941 = vmatpush.msra.mxu0 %v53
    %942 = vmatpush.msra.mxu0 %v52
    %943 = vmatpush.msra.mxu0 %v51
    %944 = vmatmul.f32.gmra.mxu0 %v926
    %v945 = vpop.f32.mrf.mxu0
    %v946 = vadd.f32 0.0, %v945
    %947 = vdwg.mxu0
    %v948 = vadd.f32 %v137, %v946
    %v949 = vmul.f32 %v948, 0.5
    %v950 = vtanh.pop %v949
    %v951 = vadd.f32 %v950, 1.0
    %v952 = vmul.f32 %v951, 0.5
    %v953 = vtanh.pop %v948
    %v954 = vmul.f32 %v952, %v837
    %956 = vrot.lane.b32.xlu0 %v953, 64
    %v957 = vpop.permute.xlu0 %956
    %v959 = vmul.f32 %v952, %v957
    %961 = vrot.lane.b32.xlu0 %v959, 32
    %v962 = vpop.permute.xlu0 %961
    %v964 = vadd.f32 %v954, %v962
    %v965 = vtanh.pop %v964
    %967 = vrot.lane.b32.xlu0 %v965, 64
    %v968 = vpop.permute.xlu0 %967
    %v970 = vmul.f32 %v952, %v968
    %972 = vst [vmem:[#allocation1] ss:$4 sm:$0xff] %v970
    %v973 = vld.sshfl [vmem:[#allocation1] sm:$0xff pattern:$0x73625140]
    %974 = vrot.lane.b32.xlu0 %v973, 32
    %v975 = vpop.permute.xlu0 %974
    %v976 = vsel %vm103, %v975, 0
    %978 = vmatpush.msra.mxu0 0.0
    %979 = vmatpush.msra.mxu0 0.0
    %980 = vmatpush.msra.mxu0 0.0
    %981 = vmatpush.msra.mxu0 0.0
    %982 = vmatpush.msra.mxu0 0.0
    %983 = vmatpush.msra.mxu0 0.0
    %984 = vmatpush.msra.mxu0 0.0
    %985 = vmatpush.msra.mxu0 0.0
    %986 = vmatpush.msra.mxu0 0.0
    %987 = vmatpush.msra.mxu0 0.0
    %988 = vmatpush.msra.mxu0 0.0
    %989 = vmatpush.msra.mxu0 0.0
    %990 = vmatpush.msra.mxu0 %v60
    %991 = vmatpush.msra.mxu0 %v59
    %992 = vmatpush.msra.mxu0 %v58
    %993 = vmatpush.msra.mxu0 %v57
    %994 = vmatmul.f32.gmra.mxu0 %v976
    %v995 = vpop.f32.mrf.mxu0
    %v996 = vadd.f32 %v202, %v995
    %997 = vdwg.mxu0
    %v998 = vsel %vm103, %v918, 0
    %1000 = vmatpush.msra.mxu0 0.0
    %1001 = vmatpush.msra.mxu0 0.0
    %1002 = vmatpush.msra.mxu0 0.0
    %1003 = vmatpush.msra.mxu0 0.0
    %1004 = vmatpush.msra.mxu0 0.0
    %1005 = vmatpush.msra.mxu0 0.0
    %1006 = vmatpush.msra.mxu0 0.0
    %1007 = vmatpush.msra.mxu0 0.0
    %1008 = vmatpush.msra.mxu0 0.0
    %1009 = vmatpush.msra.mxu0 0.0
    %1010 = vmatpush.msra.mxu0 0.0
    %1011 = vmatpush.msra.mxu0 0.0
    %1012 = vmatpush.msra.mxu0 %v64
    %1013 = vmatpush.msra.mxu0 %v63
    %1014 = vmatpush.msra.mxu0 %v62
    %1015 = vmatpush.msra.mxu0 %v61
    %1016 = vmatmul.f32.gmra.mxu0 %v998
    %v1017 = vpop.f32.mrf.mxu0
    %v1018 = vadd.f32 0.0, %v1017
    %1019 = vdwg.mxu0
    %v1020 = vadd.f32 %v996, %v1018
    %v1021 = vmul.f32 %v1020, 0.5
    %v1022 = vtanh.pop %v1021
    %v1023 = vadd.f32 %v1022, 1.0
    %v1024 = vmul.f32 %v1023, 0.5
    %v1025 = vtanh.pop %v1020
    %v1026 = vmul.f32 %v1024, %v909
    %1028 = vrot.lane.b32.xlu0 %v1025, 64
    %v1029 = vpop.permute.xlu0 %1028
    %v1031 = vmul.f32 %v1024, %v1029
    %1033 = vrot.lane.b32.xlu0 %v1031, 32
    %v1034 = vpop.permute.xlu0 %1033
    %v1036 = vadd.f32 %v1026, %v1034
    %v1037 = vtanh.pop %v1036
    %1039 = vrot.lane.b32.xlu0 %v1037, 64
    %v1040 = vpop.permute.xlu0 %1039
    %v1042 = vmul.f32 %v1024, %v1040
    %1044 = vrot.lane.b32.xlu0 %v1042, 32
    %v1045 = vpop.permute.xlu0 %1044
    %s1047 = scalar_lea.vmem [#allocation2], 12
    %1048 = vst.msk [vmem:[%s1047] sm:$0x3] %vm285, %v1045
    %1049 = vst [vmem:[#allocation1] ss:$4 sm:$0xff] %v970
    %v1050 = vld.sshfl [vmem:[#allocation1] sm:$0xff pattern:$0x73625140]
    %1051 = vrot.lane.b32.xlu0 %v1050, 32
    %v1052 = vpop.permute.xlu0 %1051
    %v1053 = vsel %vm103, %v1052, 0
    %1055 = vmatpush.msra.mxu0 0.0
    %1056 = vmatpush.msra.mxu0 0.0
    %1057 = vmatpush.msra.mxu0 0.0
    %1058 = vmatpush.msra.mxu0 0.0
    %1059 = vmatpush.msra.mxu0 0.0
    %1060 = vmatpush.msra.mxu0 0.0
    %1061 = vmatpush.msra.mxu0 0.0
    %1062 = vmatpush.msra.mxu0 0.0
    %1063 = vmatpush.msra.mxu0 0.0
    %1064 = vmatpush.msra.mxu0 0.0
    %1065 = vmatpush.msra.mxu0 0.0
    %1066 = vmatpush.msra.mxu0 0.0
    %1067 = vmatpush.msra.mxu0 %v54
    %1068 = vmatpush.msra.mxu0 %v53
    %1069 = vmatpush.msra.mxu0 %v52
    %1070 = vmatpush.msra.mxu0 %v51
    %1071 = vmatmul.f32.gmra.mxu0 %v1053
    %v1072 = vpop.f32.mrf.mxu0
    %v1073 = vadd.f32 0.0, %v1072
    %1074 = vdwg.mxu0
    %v1075 = vadd.f32 %v138, %v1073
    %v1076 = vmul.f32 %v1075, 0.5
    %v1077 = vtanh.pop %v1076
    %v1078 = vadd.f32 %v1077, 1.0
    %v1079 = vmul.f32 %v1078, 0.5
    %v1080 = vtanh.pop %v1075
    %v1081 = vmul.f32 %v1079, %v964
    %1083 = vrot.lane.b32.xlu0 %v1080, 64
    %v1084 = vpop.permute.xlu0 %1083
    %v1086 = vmul.f32 %v1079, %v1084
    %1088 = vrot.lane.b32.xlu0 %v1086, 32
    %v1089 = vpop.permute.xlu0 %1088
    %v1091 = vadd.f32 %v1081, %v1089
    %v1092 = vtanh.pop %v1091
    %1094 = vrot.lane.b32.xlu0 %v1092, 64
    %v1095 = vpop.permute.xlu0 %1094
    %v1097 = vmul.f32 %v1079, %v1095
    %1099 = vst [vmem:[#allocation1] ss:$4 sm:$0xff] %v1097
    %v1100 = vld.sshfl [vmem:[#allocation1] sm:$0xff pattern:$0x73625140]
    %1101 = vrot.lane.b32.xlu0 %v1100, 32
    %v1102 = vpop.permute.xlu0 %1101
    %v1103 = vsel %vm103, %v1102, 0
    %1105 = vmatpush.msra.mxu0 0.0
    %1106 = vmatpush.msra.mxu0 0.0
    %1107 = vmatpush.msra.mxu0 0.0
    %1108 = vmatpush.msra.mxu0 0.0
    %1109 = vmatpush.msra.mxu0 0.0
    %1110 = vmatpush.msra.mxu0 0.0
    %1111 = vmatpush.msra.mxu0 0.0
    %1112 = vmatpush.msra.mxu0 0.0
    %1113 = vmatpush.msra.mxu0 0.0
    %1114 = vmatpush.msra.mxu0 0.0
    %1115 = vmatpush.msra.mxu0 0.0
    %1116 = vmatpush.msra.mxu0 0.0
    %1117 = vmatpush.msra.mxu0 %v60
    %1118 = vmatpush.msra.mxu0 %v59
    %1119 = vmatpush.msra.mxu0 %v58
    %1120 = vmatpush.msra.mxu0 %v57
    %1121 = vmatmul.f32.gmra.mxu0 %v1103
    %v1122 = vpop.f32.mrf.mxu0
    %v1123 = vadd.f32 %v202, %v1122
    %1124 = vdwg.mxu0
    %v1125 = vsel %vm103, %v1045, 0
    %1127 = vmatpush.msra.mxu0 0.0
    %1128 = vmatpush.msra.mxu0 0.0
    %1129 = vmatpush.msra.mxu0 0.0
    %1130 = vmatpush.msra.mxu0 0.0
    %1131 = vmatpush.msra.mxu0 0.0
    %1132 = vmatpush.msra.mxu0 0.0
    %1133 = vmatpush.msra.mxu0 0.0
    %1134 = vmatpush.msra.mxu0 0.0
    %1135 = vmatpush.msra.mxu0 0.0
    %1136 = vmatpush.msra.mxu0 0.0
    %1137 = vmatpush.msra.mxu0 0.0
    %1138 = vmatpush.msra.mxu0 0.0
    %1139 = vmatpush.msra.mxu0 %v64
    %1140 = vmatpush.msra.mxu0 %v63
    %1141 = vmatpush.msra.mxu0 %v62
    %1142 = vmatpush.msra.mxu0 %v61
    %1143 = vmatmul.f32.gmra.mxu0 %v1125
    %v1144 = vpop.f32.mrf.mxu0
    %v1145 = vadd.f32 0.0, %v1144
    %1146 = vdwg.mxu0
    %v1147 = vadd.f32 %v1123, %v1145
    %v1148 = vmul.f32 %v1147, 0.5
    %v1149 = vtanh.pop %v1148
    %v1150 = vadd.f32 %v1149, 1.0
    %v1151 = vmul.f32 %v1150, 0.5
    %v1152 = vtanh.pop %v1147
    %v1153 = vmul.f32 %v1151, %v1036
    %1155 = vrot.lane.b32.xlu0 %v1152, 64
    %v1156 = vpop.permute.xlu0 %1155
    %v1158 = vmul.f32 %v1151, %v1156
    %1160 = vrot.lane.b32.xlu0 %v1158, 32
    %v1161 = vpop.permute.xlu0 %1160
    %v1163 = vadd.f32 %v1153, %v1161
    %v1164 = vtanh.pop %v1163
    %1166 = vrot.lane.b32.xlu0 %v1164, 64
    %v1167 = vpop.permute.xlu0 %1166
    %v1169 = vmul.f32 %v1151, %v1167
    %1171 = vrot.lane.b32.xlu0 %v1169, 32
    %v1172 = vpop.permute.xlu0 %1171
    %s1174 = scalar_lea.vmem [#allocation2], 14
    %1175 = vst.msk [vmem:[%s1174] sm:$0x3] %vm285, %v1172
    %1176 = vst [vmem:[#allocation1] ss:$4 sm:$0xff] %v1097
    %v1177 = vld.sshfl [vmem:[#allocation1] sm:$0xff pattern:$0x73625140]
    %1178 = vrot.lane.b32.xlu0 %v1177, 32
    %v1179 = vpop.permute.xlu0 %1178
    %1181 = vst.msk [vmem:[#allocation6] sm:$0x3] %vm285, %v1179
    %1183 = vst [vmem:[#allocation1] ss:$4 sm:$0xff] %v1091
    %v1184 = vld.sshfl [vmem:[#allocation1] sm:$0xff pattern:$0x73625140]
    %1185 = vrot.lane.b32.xlu0 %v1184, 96
    %v1186 = vpop.permute.xlu0 %1185
    %1188 = vst.msk [vmem:[#allocation7] sm:$0x3] %vm285, %v1186
    %s1189 = scalar_lea.vmem [#allocation6], 2
    %1190 = vst.msk [vmem:[%s1189] sm:$0x3] %vm285, %v1172
    %1192 = vrot.lane.b32.xlu0 %v1163, 96
    %v1193 = vpop.permute.xlu0 %1192
    %s1195 = scalar_lea.vmem [#allocation7], 2
    %1196 = vst.msk [vmem:[%s1195] sm:$0x3] %vm285, %v1193
    %v1197 = vld [vmem:[#allocation2] sm:$0x3]
    %v1198 = vld [vmem:[#allocation2 + $0x2] sm:$0x3]
    %v1199 = vld [vmem:[#allocation2 + $0x4] sm:$0x3]
    %v1200 = vld [vmem:[#allocation2 + $0x6] sm:$0x3]
    %v1201 = vld [vmem:[#allocation2 + $0x8] sm:$0x3]
    %v1202 = vld [vmem:[#allocation2 + $0xa] sm:$0x3]
    %v1203 = vld [vmem:[#allocation2 + $0xc] sm:$0x3]
    %v1204 = vld [vmem:[#allocation2 + $0xe] sm:$0x3]
    %v1205 = vmax.f32 %v1197, 0.0
    %v1206 = vmax.f32 %v1198, 0.0
    %v1207 = vmax.f32 %v1199, 0.0
    %v1208 = vmax.f32 %v1200, 0.0
    %v1209 = vmax.f32 %v1201, 0.0
    %v1210 = vmax.f32 %v1202, 0.0
    %v1211 = vmax.f32 %v1203, 0.0
    %v1212 = vmax.f32 %v1204, 0.0
    %v1213 = vld [vmem:[%s5] sm:$0xff]
    %v1214 = vld [vmem:[%s5 + $0x8] sm:$0xff]
    %v1215 = vld [vmem:[%s5 + $0x10] sm:$0xff]
    %v1216 = vld [vmem:[%s5 + $0x18] sm:$0xff]
    %v1217 = vld [vmem:[%s6] sm:$0x1]
    %v1219 = vperm.slane %v1217, 0
    %1229 = vst [vmem:[#allocation1] ss:$4 sm:$0xff] %v1205
    %s1230 = scalar_lea.vmem [#allocation1], 1
    %1231 = vst [vmem:[%s1230] ss:$4 sm:$0xff] %v1206
    %s1232 = scalar_lea.vmem [#allocation1], 2
    %1233 = vst [vmem:[%s1232] ss:$4 sm:$0xff] %v1207
    %s1234 = scalar_lea.vmem [#allocation1], 3
    %1235 = vst [vmem:[%s1234] ss:$4 sm:$0xff] %v1208
    %s1236 = scalar_lea.vmem [#allocation1], 32
    %1237 = vst [vmem:[%s1236] ss:$4 sm:$0xff] %v1209
    %s1238 = scalar_lea.vmem [#allocation1], 33
    %1239 = vst [vmem:[%s1238] ss:$4 sm:$0xff] %v1210
    %s1240 = scalar_lea.vmem [#allocation1], 34
    %1241 = vst [vmem:[%s1240] ss:$4 sm:$0xff] %v1211
    %s1242 = scalar_lea.vmem [#allocation1], 35
    %1243 = vst [vmem:[%s1242] ss:$4 sm:$0xff] %v1212
    %v1244 = vld.sshfl [vmem:[#allocation1] sm:$0xff pattern:$0x73625140]
    %v1245 = vld.sshfl [vmem:[#allocation1 + $0x20] sm:$0xff pattern:$0x73625140]
    %v1246 = vsel %vm103, %v1244, 0
    %v1248 = vsel %vm103, %v1245, 0
    %1250 = vmatpush.msra.mxu0 0.0
    %1251 = vmatpush.msra.mxu0 0.0
    %1252 = vmatpush.msra.mxu0 0.0
    %1253 = vmatpush.msra.mxu0 0.0
    %1254 = vmatpush.msra.mxu0 0.0
    %1255 = vmatpush.msra.mxu0 0.0
    %1256 = vmatpush.msra.mxu0 0.0
    %1257 = vmatpush.msra.mxu0 0.0
    %1258 = vmatpush.msra.mxu0 0.0
    %1259 = vmatpush.msra.mxu0 0.0
    %1260 = vmatpush.msra.mxu0 0.0
    %1261 = vmatpush.msra.mxu0 0.0
    %1262 = vmatpush.msra.mxu0 %v1216
    %1263 = vmatpush.msra.mxu0 %v1215
    %1264 = vmatpush.msra.mxu0 %v1214
    %1265 = vmatpush.msra.mxu0 %v1213
    %1266 = vmatmul.f32.gmra.mxu0 %v1246
    %v1267 = vpop.f32.mrf.mxu0
    %v1268 = vadd.f32 %v1219, %v1267
    %1269 = vmatmul.f32.gmra.mxu0 %v1248
    %v1270 = vpop.f32.mrf.mxu0
    %v1271 = vadd.f32 %v1219, %v1270
    %1272 = vdwg.mxu0
    %v1275 = vrot.slane %v1268, 2
    %v1276 = vrot.slane %v1268, 4
    %v1277 = vrot.slane %v1268, 6
    %v1278 = vrot.slane %v1271, 2
    %v1279 = vrot.slane %v1271, 4
    %v1280 = vrot.slane %v1271, 6
    %vm1287 = vcmask 58368
    %1288 = vst.msk [vmem:[%s7] sm:$0x3] %vm1287, %v1268
    %1289 = vst.msk [vmem:[%s7 + $0x2] sm:$0x3] %vm1287, %v1275
    %1290 = vst.msk [vmem:[%s7 + $0x4] sm:$0x3] %vm1287, %v1276
    %1291 = vst.msk [vmem:[%s7 + $0x6] sm:$0x3] %vm1287, %v1277
    %1292 = vst.msk [vmem:[%s7 + $0x8] sm:$0x3] %vm1287, %v1271
    %1293 = vst.msk [vmem:[%s7 + $0xa] sm:$0x3] %vm1287, %v1278
    %1294 = vst.msk [vmem:[%s7 + $0xc] sm:$0x3] %vm1287, %v1279
    %1295 = vst.msk [vmem:[%s7 + $0xe] sm:$0x3] %vm1287, %v1280
    // Predicated region
    $region34: #{_lambda_.1} parent=1 // pred_check
      _
    $region35: #{_lambda_.1} parent=1 // pred_check_branch
      %1297 = sbr.rel (0) target = $region37
    $region36: #{_lambda_.1} parent=1 // pred_region
      _
    $region37: #{_lambda_.1} parent=1 // pred_fallthru
      _
    // Predicated region
    $region38: #{_lambda_.1} parent=1 // pred_check
      _
    $region39: #{_lambda_.1} parent=1 // pred_check_branch
      %1299 = sbr.rel (0) target = $region41
    $region40: #{_lambda_.1} parent=1 // pred_region
      %1301 = vsyncadd [#allocation5], 0
      %s1302 = sshll.u32 [#allocation6], 4
      %s1303 = int_to_ptr.vmem [resolvable:$true] %s1302
      %s1304 = sshll.u32 %s8, 4
      %s1305 = int_to_ptr.hbm [resolvable:$true] %s1304
      %1310 = dma.vmem_to_hbm [thread:$0]  %s1303, 64, %s1305, [#allocation5], 32, 32, 2
    $region41: #{_lambda_.1} parent=1 // pred_fallthru
      _
    // Predicated region
    $region42: #{_lambda_.1} parent=1 // pred_check
      _
    $region43: #{_lambda_.1} parent=1 // pred_check_branch
      %1312 = sbr.rel (0) target = $region45
    $region44: #{_lambda_.1} parent=1 // pred_region
      %1314 = vsyncadd [#allocation8], 0
      %s1315 = sshll.u32 [#allocation7], 4
      %s1316 = int_to_ptr.vmem [resolvable:$true] %s1315
      %s1317 = sshll.u32 %s9, 4
      %s1318 = int_to_ptr.hbm [resolvable:$true] %s1317
      %1323 = dma.vmem_to_hbm [thread:$0]  %s1316, 64, %s1318, [#allocation8], 32, 32, 2
    $region45: #{_lambda_.1} parent=1 // pred_fallthru
      _
    // Predicated region
    $region46: #{_lambda_.1} parent=1 // pred_check
      _
    $region47: #{_lambda_.1} parent=1 // pred_check_branch
      %1325 = sbr.rel (0) target = $region49
    $region48: #{_lambda_.1} parent=1 // pred_region
      _
    $region49: #{_lambda_.1} parent=1 // pred_fallthru
      _
    // Predicated region
    $region50: #{_lambda_.1} parent=1 // pred_check
      _
    $region51: #{_lambda_.1} parent=1 // pred_check_branch
      %1327 = sbr.rel (0) target = $region53
    $region52: #{_lambda_.1} parent=1 // pred_region
      %1329 = dma.done [#allocation5], 64
    $region53: #{_lambda_.1} parent=1 // pred_fallthru
      _
    // Predicated region
    $region54: #{_lambda_.1} parent=1 // pred_check
      _
    $region55: #{_lambda_.1} parent=1 // pred_check_branch
      %1331 = sbr.rel (0) target = $region57
    $region56: #{_lambda_.1} parent=1 // pred_region
      %1333 = dma.done [#allocation8], 64
    $region57: #{_lambda_.1} parent=1 // pred_fallthru
      _
    %1334 = vsyncpa [#allocation4], 1
    %1335 = vsyncpa [#allocation5], 1
    %1336 = vsyncpa [#allocation8], 1

</llo_original>
